<compile_context>
chip_gen: v7x
topology: tpu7x:2x2x1
jax: 0.10.0
libtpu: 0.0.40
codegen_flags: <defaults>
</compile_context>

<pallas_src>
import functools

import jax
import jax.numpy as jnp
from jax import lax
from jax.experimental import pallas as pl
from jax.experimental.pallas import tpu as pltpu


def _gcn_kernel(adj_ref, data_ref, w_ref, b_ref, out_ref, *,
                num_of_filter, activation, agg_first):
    """One grid step: process a block of Bb batch elements.

    adj_ref : (N, N)        compute dtype (grid-invariant, VMEM resident)
    data_ref: (Bb, N, F)    compute dtype (streamed per block)
    w_ref   : (F, out_dim)  compute dtype (grid-invariant)
    b_ref   : (1, out_dim)  float32       (grid-invariant)
    out_ref : (Bb, N, K)    output dtype
    """
    Bb, N, F = data_ref.shape
    out_dim = w_ref.shape[1]
    K = num_of_filter
    cd = w_ref.dtype

    x = data_ref[...]                                        # (Bb, N, F)
    adj_b = jnp.broadcast_to(adj_ref[...], (Bb, N, N))       # batched adj view

    if agg_first:
        # 1) adj @ x for the whole block (batched MXU dot, f32 accumulation).
        ax = lax.dot_general(
            adj_b, x,
            dimension_numbers=(((2,), (1,)), ((0,), (0,))),
            preferred_element_type=jnp.float32)              # (Bb, N, F) f32
        # 2) Linear fused across the block: one wide lane-dense matmul.
        y = jnp.dot(ax.astype(cd).reshape(Bb * N, F), w_ref[...],
                    preferred_element_type=jnp.float32)      # (Bb*N, out)
        y = (y + b_ref[...]).reshape(Bb, N, out_dim)         # f32 epilogue
    else:
        # Cheaper when out_dim < F: project first, then aggregate.
        z = jnp.dot(x.reshape(Bb * N, F), w_ref[...],
                    preferred_element_type=jnp.float32)      # (Bb*N, out)
        z = z.astype(cd).reshape(Bb, N, out_dim)
        y = lax.dot_general(
            adj_b, z,
            dimension_numbers=(((2,), (1,)), ((0,), (0,))),
            preferred_element_type=jnp.float32)              # (Bb, N, out) f32
        y = y + b_ref[...]

    # 3) Activation in f32, single store at the end.
    if activation == "GLU":
        lhs = y[..., :K]
        rhs = y[..., K:]
        # sigmoid = 1 / (1 + exp(-x)); exp + approx reciprocal both run on EUP.
        res = lhs * pl.reciprocal(1.0 + jnp.exp(-rhs), approx=True)
    else:  # "relu"
        res = jnp.maximum(y, 0.0)

    out_ref[...] = res.astype(out_ref.dtype)


def gcn_operation(data, adj, weight, bias, *, num_of_filter,
                  activation="GLU", batch_block=None,
                  compute_dtype=jnp.bfloat16):
    """Pallas implementation of GcnOperation.forward.

    data  : (B, N, F)       adj : (N, N)
    weight: (out_dim, F)    PyTorch nn.Linear layout; out_dim = 2K (GLU) or K (relu)
    bias  : (out_dim,)
    Returns (B, N, K) in data.dtype.
    """
    if activation not in {"GLU", "relu"}:
        raise ValueError(f"unsupported activation: {activation}")
    B, N, F = data.shape
    K = num_of_filter
    out_dim, in_dim = weight.shape
    expected_out = 2 * K if activation == "GLU" else K
    if out_dim != expected_out:
        raise ValueError(
            f"weight.shape[0]={out_dim} but expected {expected_out} for "
            f"activation={activation!r} with num_of_filter={K}")
    if in_dim != F:
        raise ValueError(f"weight.shape[1]={in_dim} but data feature dim is {F}")
    if bias.shape != (out_dim,):
        raise ValueError(f"bias shape {bias.shape} != ({out_dim},)")
    if adj.shape != (N, N):
        raise ValueError(f"adj shape {adj.shape} != ({N}, {N})")

    out_dtype = data.dtype
    cd = jnp.dtype(compute_dtype)

    # Matmul order by flop count: (adj@x)@W == adj@(x@W) (associativity).
    # agg-first  : N*N*F + N*F*out    per batch
    # proj-first : N*F*out + N*N*out  per batch
    agg_first = F <= out_dim

    # Batch block: amortize the ~0.35us per-grid-step overhead with the largest
    # block whose streamed (double-buffered) tiles stay inside a VMEM budget,
    # while keeping >= 2 grid steps so dual-TC parts can split the grid.
    if batch_block is None:
        bytes_per_batch = (N * F * cd.itemsize
                           + N * K * jnp.dtype(out_dtype).itemsize)
        vmem_budget = 8 * 1024 * 1024            # streamed, double-buffered
        bb = max(1, vmem_budget // (2 * bytes_per_batch))
        if B >= 2:
            bb = min(bb, -(-B // 2))             # keep at least 2 grid steps
        batch_block = max(1, min(bb, B))
    Bb = max(1, min(int(batch_block), B))
    num_blocks = -(-B // Bb)                     # cdiv
    Bp = num_blocks * Bb
    if Bp != B:                                  # pad batch; padded rows dropped
        data = jnp.pad(data, ((0, Bp - B), (0, 0), (0, 0)))

    adj_c = adj.astype(cd)
    data_c = data.astype(cd)
    w_t = weight.T.astype(cd)                              # (F, out_dim)
    b2d = bias.reshape(1, out_dim).astype(jnp.float32)     # f32 epilogue bias

    kernel = functools.partial(
        _gcn_kernel, num_of_filter=K, activation=activation,
        agg_first=agg_first)

    itemsize = cd.itemsize
    if agg_first:
        flops = 2 * Bp * (N * N * F + N * F * out_dim)
    else:
        flops = 2 * Bp * (N * F * out_dim + N * N * out_dim)
    transcendentals = Bp * N * K if activation == "GLU" else 0
    bytes_accessed = (adj_c.size * itemsize + data_c.size * itemsize
                      + w_t.size * itemsize + b2d.size * 4
                      + Bp * N * K * jnp.dtype(out_dtype).itemsize)
    cost = pl.CostEstimate(flops=flops, transcendentals=transcendentals,
                           bytes_accessed=bytes_accessed)

    out = pl.pallas_call(
        kernel,
        out_shape=jax.ShapeDtypeStruct((Bp, N, K), out_dtype),
        grid_spec=pltpu.PrefetchScalarGridSpec(
            num_scalar_prefetch=0,
            grid=(num_blocks,),
            in_specs=[
                pl.BlockSpec((N, N), lambda i: (0, 0)),           # adj (resident)
                pl.BlockSpec((Bb, N, F), lambda i: (i, 0, 0)),    # data (streamed)
                pl.BlockSpec((F, out_dim), lambda i: (0, 0)),     # weight (resident)
                pl.BlockSpec((1, out_dim), lambda i: (0, 0)),     # bias (resident)
            ],
            out_specs=pl.BlockSpec((Bb, N, K), lambda i: (i, 0, 0)),
        ),
        compiler_params=pltpu.CompilerParams(
            dimension_semantics=("parallel",),
        ),
        cost_estimate=cost,
    )(adj_c, data_c, w_t, b2d)

    if Bp != B:
        out = out[:B]
    return out


def _reference(data, adj, weight, bias, num_of_filter, activation):
    x = jnp.einsum("ij,bjf->bif", adj, data)
    y = x @ weight.T + bias
    if activation == "GLU":
        lhs, rhs = y[..., :num_of_filter], y[..., num_of_filter:]
        return lhs * jax.nn.sigmoid(rhs)
    return jnp.maximum(y, 0.0)


if __name__ == "__main__":
    # Shapes consistent with STSGCN's GcnOperation (N = 3 * num_of_vertices).
    key = jax.random.PRNGKey(0)
    k_data, k_adj, k_w1, k_b1, k_data2, k_w2, k_b2 = jax.random.split(key, 7)

    # --- GLU path (agg-first order): bf16 MXU inputs, f32 accum / epilogue ---
    B, N, F, K = 16, 48, 32, 64
    data = jax.random.normal(k_data, (B, N, F), dtype=jnp.float32)
    adj = jax.random.normal(k_adj, (N, N), dtype=jnp.float32) * 0.1
    w_glu = jax.random.normal(k_w1, (2 * K, F), dtype=jnp.float32) * 0.05
    b_glu = jax.random.normal(k_b1, (2 * K,), dtype=jnp.float32) * 0.05

    out_glu = gcn_operation(data, adj, w_glu, b_glu,
                            num_of_filter=K, activation="GLU")
    out_glu = jax.block_until_ready(out_glu)
    ref_glu = _reference(data, adj, w_glu, b_glu, K, "GLU")
    assert out_glu.shape == (B, N, K), out_glu.shape
    assert jnp.allclose(out_glu, ref_glu, atol=3e-2, rtol=3e-2), \
        float(jnp.max(jnp.abs(out_glu - ref_glu)))

    # --- relu path (proj-first order, F > out_dim): f32 compute, odd batch
    #     exercises the padding path ---
    B2, F2, K2 = 5, 96, 32
    data2 = jax.random.normal(k_data2, (B2, N, F2), dtype=jnp.float32)
    w_relu = jax.random.normal(k_w2, (K2, F2), dtype=jnp.float32) * 0.05
    b_relu = jax.random.normal(k_b2, (K2,), dtype=jnp.float32) * 0.05
    out_relu = gcn_operation(data2, adj, w_relu, b_relu,
                             num_of_filter=K2, activation="relu",
                             compute_dtype=jnp.float32)
    out_relu = jax.block_until_ready(out_relu)
    ref_relu = _reference(data2, adj, w_relu, b_relu, K2, "relu")
    assert out_relu.shape == (B2, N, K2), out_relu.shape
    assert jnp.allclose(out_relu, ref_relu, atol=1e-4, rtol=1e-4), \
        float(jnp.max(jnp.abs(out_relu - ref_relu)))

    print("KERNEL_OK")
</pallas_src>

<mosaic_0001>
module attributes {stable_mosaic.version = 11 : i64} {
  func.func @_gcn_kernel(%arg0: i32, %arg1: memref<48x48xbf16, #tpu.memory_space<vmem>>, %arg2: memref<8x48x32xbf16, #tpu.memory_space<vmem>>, %arg3: memref<32x128xbf16, #tpu.memory_space<vmem>>, %arg4: memref<1x128xf32, #tpu.memory_space<vmem>>, %arg5: memref<8x48x64xf32, #tpu.memory_space<vmem>>) attributes {dimension_semantics = [#tpu.dimension_semantics<parallel>], iteration_bounds = array<i64: 2>, scalar_prefetch = 0 : i64, scratch_operands = 0 : i64, tpu.core_type = #tpu.core_type<tc>, window_params = [{pipeline_mode = #tpu.pipeline_mode<synchronous>, transform_indices = @transform_0, window_bounds = array<i64: 48, 48>}, {transform_indices = @transform_1, window_bounds = array<i64: 8, 48, 32>}, {pipeline_mode = #tpu.pipeline_mode<synchronous>, transform_indices = @transform_2, window_bounds = array<i64: 32, 128>}, {pipeline_mode = #tpu.pipeline_mode<synchronous>, transform_indices = @transform_3, window_bounds = array<i64: 1, 128>}, {transform_indices = @transform_4, window_bounds = array<i64: 8, 48, 64>}]} {
    %c0 = arith.constant 0 : index
    %c0_0 = arith.constant 0 : index
    %c0_1 = arith.constant 0 : index
    %0 = vector.load %arg2[%c0, %c0_0, %c0_1] : memref<8x48x32xbf16, #tpu.memory_space<vmem>>, vector<8x48x32xbf16>
    %c0_2 = arith.constant 0 : index
    %c0_3 = arith.constant 0 : index
    %1 = vector.load %arg1[%c0_2, %c0_3] : memref<48x48xbf16, #tpu.memory_space<vmem>>, vector<48x48xbf16>
    %2 = vector.shape_cast %1 : vector<48x48xbf16> to vector<1x48x48xbf16>
    %3 = vector.broadcast %2 : vector<1x48x48xbf16> to vector<8x48x48xbf16>
    %cst = arith.constant dense<0.000000e+00> : vector<8x48x32xf32>
    %4 = tpu.matmul %3, %0, %cst {dimension_numbers = #tpu.dot_dimension_numbers<[2], [1], [1], [2], [0, 0, 0, 1, 1, 2], [0], [0]>} : vector<8x48x48xbf16>, vector<8x48x32xbf16>, vector<8x48x32xf32> -> vector<8x48x32xf32>
    %5 = arith.truncf %4 : vector<8x48x32xf32> to vector<8x48x32xbf16>
    %6 = vector.shape_cast %5 : vector<8x48x32xbf16> to vector<384x32xbf16>
    %c0_4 = arith.constant 0 : index
    %c0_5 = arith.constant 0 : index
    %7 = vector.load %arg3[%c0_4, %c0_5] : memref<32x128xbf16, #tpu.memory_space<vmem>>, vector<32x128xbf16>
    %cst_6 = arith.constant dense<0.000000e+00> : vector<384x128xf32>
    %8 = tpu.matmul %6, %7, %cst_6 {dimension_numbers = #tpu.dot_dimension_numbers<[1], [0], [0], [1], [0, 0, 1, 1], [], []>} : vector<384x32xbf16>, vector<32x128xbf16>, vector<384x128xf32> -> vector<384x128xf32>
    %c0_7 = arith.constant 0 : index
    %c0_8 = arith.constant 0 : index
    %9 = vector.load %arg4[%c0_7, %c0_8] : memref<1x128xf32, #tpu.memory_space<vmem>>, vector<1x128xf32>
    %10 = vector.broadcast %9 : vector<1x128xf32> to vector<384x128xf32>
    %11 = arith.addf %8, %10 : vector<384x128xf32>
    %12 = vector.shape_cast %11 : vector<384x128xf32> to vector<8x48x128xf32>
    %13 = vector.extract_strided_slice %12 {offsets = [0, 0, 0], sizes = [8, 48, 64], strides = [1, 1, 1]} : vector<8x48x128xf32> to vector<8x48x64xf32>
    %14 = vector.extract_strided_slice %12 {offsets = [0, 0, 64], sizes = [8, 48, 64], strides = [1, 1, 1]} : vector<8x48x128xf32> to vector<8x48x64xf32>
    %cst_9 = arith.constant 0.000000e+00 : f32
    %15 = vector.broadcast %cst_9 : f32 to vector<8x48x64xf32>
    %16 = arith.subf %15, %14 : vector<8x48x64xf32>
    %17 = math.exp %16 : vector<8x48x64xf32>
    %cst_10 = arith.constant 1.000000e+00 : f32
    %18 = vector.broadcast %cst_10 : f32 to vector<8x48x64xf32>
    %19 = arith.addf %18, %17 : vector<8x48x64xf32>
    %20 = tpu.reciprocal %19 {approx = true} : vector<8x48x64xf32> -> vector<8x48x64xf32>
    %21 = arith.mulf %13, %20 : vector<8x48x64xf32>
    %c0_11 = arith.constant 0 : index
    %c0_12 = arith.constant 0 : index
    %c0_13 = arith.constant 0 : index
    %22 = vector.load %arg5[%c0_11, %c0_12, %c0_13] : memref<8x48x64xf32, #tpu.memory_space<vmem>>, vector<8x48x64xf32>
    tpu.vector_store %arg5[%c0_11, %c0_12, %c0_13], %21 {strides = array<i32>} : memref<8x48x64xf32, #tpu.memory_space<vmem>>, vector<8x48x64xf32>,
    return
  }
  func.func @transform_0(%arg0: i32) -> (i32, i32) {
    %c0_i32 = arith.constant 0 : i32
    %c0_i32_0 = arith.constant 0 : i32
    %c0_i32_1 = arith.constant 0 : i32
    return %c0_i32, %c0_i32_0 : i32, i32
  }
  func.func @transform_1(%arg0: i32) -> (i32, i32, i32) {
    %c0_i32 = arith.constant 0 : i32
    %c0_i32_0 = arith.constant 0 : i32
    %c0_i32_1 = arith.constant 0 : i32
    return %arg0, %c0_i32, %c0_i32_0 : i32, i32, i32
  }
  func.func @transform_2(%arg0: i32) -> (i32, i32) {
    %c0_i32 = arith.constant 0 : i32
    %c0_i32_0 = arith.constant 0 : i32
    %c0_i32_1 = arith.constant 0 : i32
    return %c0_i32, %c0_i32_0 : i32, i32
  }
  func.func @transform_3(%arg0: i32) -> (i32, i32) {
    %c0_i32 = arith.constant 0 : i32
    %c0_i32_0 = arith.constant 0 : i32
    %c0_i32_1 = arith.constant 0 : i32
    return %c0_i32, %c0_i32_0 : i32, i32
  }
  func.func @transform_4(%arg0: i32) -> (i32, i32, i32) {
    %c0_i32 = arith.constant 0 : i32
    %c0_i32_0 = arith.constant 0 : i32
    %c0_i32_1 = arith.constant 0 : i32
    return %arg0, %c0_i32, %c0_i32_0 : i32, i32, i32
  }
}

</mosaic_0001>

<llo_original>
// kernel: tpu_custom_call.1
$region0: #{tpu_custom_call.1}
  #allocation0 [shape = 'u32[]', space=smem, size = 0x4, offset = 0x4, fixed_abs, tag = 'smem constant byte address 0x4 - core index']
  #allocation1 [shape = 'u32[144,128]{1,0:T(1,128)}', space=vmem, size = 0x12000, scoped, tag = 'internal scratch']
  %s0 = inlined_call_operand.vmem [shape: bf16[48,48], index: 0, kind: input, shape index: {}]
  %s1 = inlined_call_operand.vmem [shape: bf16[16,48,32], index: 1, kind: input, shape index: {}]
  %s2 = inlined_call_operand.vmem [shape: bf16[32,128], index: 2, kind: input, shape index: {}]
  %s3 = inlined_call_operand.vmem [shape: f32[1,128], index: 3, kind: input, shape index: {}]
  %s4 = inlined_call_operand.hbm [shape: f32[16,48,64], index: 4, kind: output, shape index: {}]
  %s5 = sld [smem:[#allocation0]]
  $region49: #{tpu_custom_call.1} parent=0
    _
  %s7 = ssub.s32 1, %s5
  %s8 = scalar_select 0, %s7, %s5
  $region1: #{tpu_custom_call.1} parent=0
    #allocation2 [shape = 'u8[393216]{0}', space=vmem, size = 0x60000, scoped, tag = 'output window, operand 0']
    #allocation3 [shape = 's32[2]{0}', space=sflag, size = 0x8, scoped, tag = 'scoped memory for tpu_custom_call.1']
    %9 = vsyncpa [#allocation3], 0
    %s10 = scalar_lea.sflag [#allocation3], 1
    %11 = vsyncpa %s10, 0
    loop: start=0, step=1, limit=4
    $region2: #{tpu_custom_call.1} parent=1 // loop_pre_header
      _
    $region3: #{tpu_custom_call.1} parent=1 // loop_header
      %s13 = sphi 0, %s17
      %p14 = scmp.ge.s32.totalorder %s13, 4
      %s21 = sphi 0, %s21
      %s23 = sphi 0, %s21
      %s24 = sphi 0, %s23
      %s38 = sphi 0, %s24
      %s44 = sphi 0, %s46
      %s47 = sphi 0, %s44
      %s48 = sphi 0, %s47
      %s64 = sphi 0, %s48
      %s68 = sphi 0, %s68
      %s70 = sphi 0, %s68
      %s71 = sphi 0, %s70
      %s85 = sphi 0, %s71
      %s89 = sphi 0, %s89
      %s91 = sphi 0, %s89
      %s92 = sphi 0, %s91
      %s106 = sphi 0, %s92
      %s112 = sphi 0, %s114
      %s115 = sphi 0, %s112
      %s116 = sphi 0, %s115
      %s132 = sphi 0, %s116
    $region4: #{tpu_custom_call.1} parent=1 // loop_header_branch
      %16 = sbr.rel (%p14) target = $region8
    $region5: #{tpu_custom_call.1} parent=1 // loop_body
      %s18 = ssub.s32 %s13, 1
      %s19 = ssub.s32 %s13, 2
      %s20 = sadd.s32 %s13, 1
      %s22 = sadd.s32 %s21, 1
      %p25 = scmp.eq.s32.totalorder %s13, 1
      %p26 = scmp.ne.s32.totalorder %s21, %s23
      %p27 = scmp.eq.s32.totalorder %s13, 0
      %p28 = por %p26, %p27
      %p29 = scmp.ne.s32.totalorder %s21, %s23
      %p30 = scmp.eq.s32.totalorder %s18, 1
      %p31 = por %p29, %p30
      %p32 = scmp.ne.s32.totalorder %s23, %s24
      %p33 = scmp.eq.s32.totalorder %s18, 0
      %p34 = por %p32, %p33
      %p35 = scmp.ne.s32.totalorder %s23, %s24
      %p36 = scmp.eq.s32.totalorder %s19, 1
      %p37 = por %p35, %p36
      %p39 = scmp.ne.s32.totalorder %s24, %s38
      %p40 = scmp.eq.s32.totalorder %s19, 0
      %p41 = por %p39, %p40
      %s42 = ssub.s32 %s13, %s20
      %p43 = scmp.eq.s32.totalorder %s42, 0
      %s45 = sadd.s32 %s44, 1
      %s46 = scalar_select %p43, %s44, %s45
      %p49 = pneg %p43
      %p50 = scmp.eq.s32.totalorder %s13, 1
      %p51 = por %p49, %p50
      %p52 = scmp.ne.s32.totalorder %s44, %s47
      %p53 = scmp.eq.s32.totalorder %s13, 0
      %p54 = por %p52, %p53
      %p55 = scmp.ne.s32.totalorder %s44, %s47
      %p56 = scmp.eq.s32.totalorder %s18, 1
      %p57 = por %p55, %p56
      %p58 = scmp.ne.s32.totalorder %s47, %s48
      %p59 = scmp.eq.s32.totalorder %s18, 0
      %p60 = por %p58, %p59
      %p61 = scmp.ne.s32.totalorder %s47, %s48
      %p62 = scmp.eq.s32.totalorder %s19, 1
      %p63 = por %p61, %p62
      %p65 = scmp.ne.s32.totalorder %s48, %s64
      %p66 = scmp.eq.s32.totalorder %s19, 0
      %p67 = por %p65, %p66
      %s69 = sadd.s32 %s68, 1
      %p72 = scmp.eq.s32.totalorder %s13, 1
      %p73 = scmp.ne.s32.totalorder %s68, %s70
      %p74 = scmp.eq.s32.totalorder %s13, 0
      %p75 = por %p73, %p74
      %p76 = scmp.ne.s32.totalorder %s68, %s70
      %p77 = scmp.eq.s32.totalorder %s18, 1
      %p78 = por %p76, %p77
      %p79 = scmp.ne.s32.totalorder %s70, %s71
      %p80 = scmp.eq.s32.totalorder %s18, 0
      %p81 = por %p79, %p80
      %p82 = scmp.ne.s32.totalorder %s70, %s71
      %p83 = scmp.eq.s32.totalorder %s19, 1
      %p84 = por %p82, %p83
      %p86 = scmp.ne.s32.totalorder %s71, %s85
      %p87 = scmp.eq.s32.totalorder %s19, 0
      %p88 = por %p86, %p87
      %s90 = sadd.s32 %s89, 1
      %p93 = scmp.eq.s32.totalorder %s13, 1
      %p94 = scmp.ne.s32.totalorder %s89, %s91
      %p95 = scmp.eq.s32.totalorder %s13, 0
      %p96 = por %p94, %p95
      %p97 = scmp.ne.s32.totalorder %s89, %s91
      %p98 = scmp.eq.s32.totalorder %s18, 1
      %p99 = por %p97, %p98
      %p100 = scmp.ne.s32.totalorder %s91, %s92
      %p101 = scmp.eq.s32.totalorder %s18, 0
      %p102 = por %p100, %p101
      %p103 = scmp.ne.s32.totalorder %s91, %s92
      %p104 = scmp.eq.s32.totalorder %s19, 1
      %p105 = por %p103, %p104
      %p107 = scmp.ne.s32.totalorder %s92, %s106
      %p108 = scmp.eq.s32.totalorder %s19, 0
      %p109 = por %p107, %p108
      %s110 = ssub.s32 %s13, %s20
      %p111 = scmp.eq.s32.totalorder %s110, 0
      %s113 = sadd.s32 %s112, 1
      %s114 = scalar_select %p111, %s112, %s113
      %p117 = pneg %p111
      %p118 = scmp.eq.s32.totalorder %s13, 1
      %p119 = por %p117, %p118
      %p120 = scmp.ne.s32.totalorder %s112, %s115
      %p121 = scmp.eq.s32.totalorder %s13, 0
      %p122 = por %p120, %p121
      %p123 = scmp.ne.s32.totalorder %s112, %s115
      %p124 = scmp.eq.s32.totalorder %s18, 1
      %p125 = por %p123, %p124
      %p126 = scmp.ne.s32.totalorder %s115, %s116
      %p127 = scmp.eq.s32.totalorder %s18, 0
      %p128 = por %p126, %p127
      %p129 = scmp.ne.s32.totalorder %s115, %s116
      %p130 = scmp.eq.s32.totalorder %s19, 1
      %p131 = por %p129, %p130
      %p133 = scmp.ne.s32.totalorder %s116, %s132
      %p134 = scmp.eq.s32.totalorder %s19, 0
      %p135 = por %p133, %p134
      %p136 = scmp.le.s32.totalorder 1, %s13
      %p137 = scmp.lt.s32.totalorder %s13, 3
      %p138 = pnand %p136, %p137
      %p139 = pneg %p138
      // Predicated region
      $region9: #{tpu_custom_call.1} parent=5 // pred_check
        _
      $region10: #{tpu_custom_call.1} parent=5 // pred_check_branch
        %141 = sbr.rel (%p138) target = $region12
      $region11: #{tpu_custom_call.1} parent=5 // pred_region
        %s142 = ssub.s32 %s13, 1
        // Predicated region
        $region13: #{tpu_custom_call.1} parent=11 // pred_check
          %p143 = pneg %p34
        $region14: #{tpu_custom_call.1} parent=11 // pred_check_branch
          %145 = sbr.rel (%p143) target = $region16
        $region15: #{tpu_custom_call.1} parent=11 // pred_region
          _
        $region16: #{tpu_custom_call.1} parent=11 // pred_fallthru
          _
        // Predicated region
        $region17: #{tpu_custom_call.1} parent=11 // pred_check
          %p146 = pneg %p81
        $region18: #{tpu_custom_call.1} parent=11 // pred_check_branch
          %148 = sbr.rel (%p146) target = $region20
        $region19: #{tpu_custom_call.1} parent=11 // pred_region
          _
        $region20: #{tpu_custom_call.1} parent=11 // pred_fallthru
          _
        // Predicated region
        $region21: #{tpu_custom_call.1} parent=11 // pred_check
          %p149 = pneg %p102
        $region22: #{tpu_custom_call.1} parent=11 // pred_check_branch
          %151 = sbr.rel (%p149) target = $region24
        $region23: #{tpu_custom_call.1} parent=11 // pred_region
          _
        $region24: #{tpu_custom_call.1} parent=11 // pred_fallthru
          _
      $region12: #{tpu_custom_call.1} parent=5 // pred_fallthru
        _
      %p152 = scmp.lt.s32.totalorder %s13, 2
      // Predicated region
      $region25: #{tpu_custom_call.1} parent=5 // pred_check
        %p153 = pneg %p152
      $region26: #{tpu_custom_call.1} parent=5 // pred_check_branch
        %155 = sbr.rel (%p153) target = $region28
      $region27: #{tpu_custom_call.1} parent=5 // pred_region
        // Predicated region
        $region29: #{tpu_custom_call.1} parent=27 // pred_check
          %p156 = pneg %p54
        $region30: #{tpu_custom_call.1} parent=27 // pred_check_branch
          %158 = sbr.rel (%p156) target = $region32
        $region31: #{tpu_custom_call.1} parent=27 // pred_region
          %s159 = smul.u32 8, %s13
          %p160 = scmp.lt.s32.totalorder %s159, 15
          %s161 = scalar_select %p160, %s159, 15
          %s162 = smul.addr %s161, 6
          %s163 = smul.addr %s162, 4
          %s164 = scalar_lea.vmem %s1, %s163
          %s165 = smul.u32 8, %s13
        $region32: #{tpu_custom_call.1} parent=27 // pred_fallthru
          _
      $region28: #{tpu_custom_call.1} parent=5 // pred_fallthru
        _
      %p166 = scmp.le.s32.totalorder 1, %s13
      %p167 = scmp.lt.s32.totalorder %s13, 3
      %p168 = pnand %p166, %p167
      %p169 = pneg %p168
      // Predicated region
      $region33: #{tpu_custom_call.1} parent=5 // pred_check
        _
      $region34: #{tpu_custom_call.1} parent=5 // pred_check_branch
        %171 = sbr.rel (%p168) target = $region36
      $region35: #{tpu_custom_call.1} parent=5 // pred_region
        %s172 = ssub.s32 %s13, 1
        %p173 = pneg %p34
        %p174 = pneg %p31
        %s175 = smul.u32 8, %s18
        %p176 = scmp.lt.s32.totalorder %s175, 15
        %s177 = scalar_select %p176, %s175, 15
        %s178 = smul.addr %s177, 6
        %s179 = smul.addr %s178, 4
        %s180 = scalar_lea.vmem %s1, %s179
        %p181 = pneg %p60
        %p182 = pneg %p57
        %p183 = pneg %p81
        %p184 = pneg %p78
        %p185 = pneg %p102
        %p186 = pneg %p99
        %p187 = pneg %p128
        %p188 = pneg %p125
        %s189 = sand.u32 %s115, 1
        %s190 = scalar_lea.sflag [#allocation3], %s189
        %s191 = sand.u32 %s115, 1
        %s192 = smul.addr %s191, 384
        %s193 = scalar_lea.vmem [#allocation2], %s192
        %s194 = smul.u32 8, %s18
        %p195 = scmp.lt.s32.totalorder %s194, 15
        %s196 = scalar_select %p195, %s194, 15
        %s197 = smul.addr %s196, 6
        %s198 = smul.addr %s197, 4
        %s199 = scalar_lea.vmem %s1, %s198
        %s200 = smul.u32 8, %s18
        %s201 = smul.u32 8, %s18
        %v203 = vld [vmem:[%s199] sm:$0xf]
        %v204 = vld [vmem:[%s199 + $0x4] sm:$0xf]
        %v205 = vld [vmem:[%s199 + $0x8] sm:$0xf]
        %v206 = vld [vmem:[%s199 + $0xc] sm:$0xf]
        %v207 = vld [vmem:[%s199 + $0x10] sm:$0xf]
        %v208 = vld [vmem:[%s199 + $0x14] sm:$0xf]
        %v209 = vld [vmem:[%s199 + $0x18] sm:$0xf]
        %v210 = vld [vmem:[%s199 + $0x1c] sm:$0xf]
        %v211 = vld [vmem:[%s199 + $0x20] sm:$0xf]
        %v212 = vld [vmem:[%s199 + $0x24] sm:$0xf]
        %v213 = vld [vmem:[%s199 + $0x28] sm:$0xf]
        %v214 = vld [vmem:[%s199 + $0x2c] sm:$0xf]
        %v215 = vld [vmem:[%s199 + $0x30] sm:$0xf]
        %v216 = vld [vmem:[%s199 + $0x34] sm:$0xf]
        %v217 = vld [vmem:[%s199 + $0x38] sm:$0xf]
        %v218 = vld [vmem:[%s199 + $0x3c] sm:$0xf]
        %v219 = vld [vmem:[%s199 + $0x40] sm:$0xf]
        %v220 = vld [vmem:[%s199 + $0x44] sm:$0xf]
        %v221 = vld [vmem:[%s199 + $0x48] sm:$0xf]
        %v222 = vld [vmem:[%s199 + $0x4c] sm:$0xf]
        %v223 = vld [vmem:[%s199 + $0x50] sm:$0xf]
        %v224 = vld [vmem:[%s199 + $0x54] sm:$0xf]
        %v225 = vld [vmem:[%s199 + $0x58] sm:$0xf]
        %v226 = vld [vmem:[%s199 + $0x5c] sm:$0xf]
        %v227 = vld [vmem:[%s199 + $0x60] sm:$0xf]
        %v228 = vld [vmem:[%s199 + $0x64] sm:$0xf]
        %v229 = vld [vmem:[%s199 + $0x68] sm:$0xf]
        %v230 = vld [vmem:[%s199 + $0x6c] sm:$0xf]
        %v231 = vld [vmem:[%s199 + $0x70] sm:$0xf]
        %v232 = vld [vmem:[%s199 + $0x74] sm:$0xf]
        %v233 = vld [vmem:[%s199 + $0x78] sm:$0xf]
        %v234 = vld [vmem:[%s199 + $0x7c] sm:$0xf]
        %v235 = vld [vmem:[%s199 + $0x80] sm:$0xf]
        %v236 = vld [vmem:[%s199 + $0x84] sm:$0xf]
        %v237 = vld [vmem:[%s199 + $0x88] sm:$0xf]
        %v238 = vld [vmem:[%s199 + $0x8c] sm:$0xf]
        %v239 = vld [vmem:[%s199 + $0x90] sm:$0xf]
        %v240 = vld [vmem:[%s199 + $0x94] sm:$0xf]
        %v241 = vld [vmem:[%s199 + $0x98] sm:$0xf]
        %v242 = vld [vmem:[%s199 + $0x9c] sm:$0xf]
        %v243 = vld [vmem:[%s199 + $0xa0] sm:$0xf]
        %v244 = vld [vmem:[%s199 + $0xa4] sm:$0xf]
        %v245 = vld [vmem:[%s199 + $0xa8] sm:$0xf]
        %v246 = vld [vmem:[%s199 + $0xac] sm:$0xf]
        %v247 = vld [vmem:[%s199 + $0xb0] sm:$0xf]
        %v248 = vld [vmem:[%s199 + $0xb4] sm:$0xf]
        %v249 = vld [vmem:[%s199 + $0xb8] sm:$0xf]
        %v250 = vld [vmem:[%s199 + $0xbc] sm:$0xf]
        %v251 = vld [vmem:[%s0] sm:$0xf]
        %v252 = vld [vmem:[%s0 + $0x4] sm:$0xf]
        %v253 = vld [vmem:[%s0 + $0x8] sm:$0xf]
        %v254 = vld [vmem:[%s0 + $0xc] sm:$0xf]
        %v255 = vld [vmem:[%s0 + $0x10] sm:$0xf]
        %v256 = vld [vmem:[%s0 + $0x14] sm:$0xf]
        %v263 = vunpack.c.l.b16 %v251
        %v264 = vunpack.c.l.b16 %v252
        %v265 = vunpack.c.l.b16 %v253
        %v266 = vunpack.c.l.b16 %v254
        %v267 = vunpack.c.l.b16 %v255
        %v268 = vunpack.c.l.b16 %v256
        %v269 = vpack.c.b16 %v264, %v263
        %v270 = vpack.c.b16 %v266, %v265
        %v271 = vpack.c.b16 %v268, %v267
        %v278 = vunpack.c.l.b16 %v203
        %v279 = vunpack.c.l.b16 %v204
        %v280 = vunpack.c.l.b16 %v205
        %v281 = vunpack.c.l.b16 %v206
        %v282 = vunpack.c.l.b16 %v207
        %v283 = vunpack.c.l.b16 %v208
        %v284 = vpack.c.b16 %v279, %v278
        %v285 = vpack.c.b16 %v281, %v280
        %v286 = vpack.c.b16 %v283, %v282
        %vm290 = vcmask 392192
        %v292 = vsel %vm290, %v269, 0
        %v295 = vsel %vm290, %v270, 0
        %v298 = vsel %vm290, %v271, 0
        %300 = vmatprep.subr.bf16.mxu0 0
        %301 = vmatpush1.bf16.msra.mxu0 %v284
        %302 = vmatprep.subr.bf16.mxu0 0
        %303 = vmatpush1.bf16.msra.mxu0 %v285
        %304 = vmatprep.subr.bf16.mxu0 0
        %305 = vmatpush1.bf16.msra.mxu0 %v286
        %306 = vmatprep.subr.bf16.mxu0 0
        %307 = vmatpush1.bf16.msra.mxu0 0
        %308 = vmatprep.subr.bf16.mxu0 0
        %309 = vmatpush1.bf16.msra.mxu0 0
        %310 = vmatprep.subr.bf16.mxu0 0
        %311 = vmatpush1.bf16.msra.mxu0 0
        %312 = vmatprep.subr.bf16.mxu0 0
        %313 = vmatpush1.bf16.msra.mxu0 0
        %314 = vmatprep.subr.bf16.mxu0 0
        %315 = vmatpush1.bf16.msra.mxu0 0
        %316 = vmatprep.subr.bf16.mxu0 0
        %317 = vmatpush1.bf16.msra.mxu0 0
        %318 = vmatprep.subr.bf16.mxu0 0
        %319 = vmatpush1.bf16.msra.mxu0 0
        %320 = vmatprep.subr.bf16.mxu0 0
        %321 = vmatpush1.bf16.msra.mxu0 0
        %322 = vmatprep.subr.bf16.mxu0 0
        %323 = vmatpush1.bf16.msra.mxu0 0
        %324 = vmatprep.subr.bf16.mxu0 0
        %325 = vmatpush1.bf16.msra.mxu0 0
        %326 = vmatprep.subr.bf16.mxu0 0
        %327 = vmatpush1.bf16.msra.mxu0 0
        %328 = vmatprep.subr.bf16.mxu0 0
        %329 = vmatpush1.bf16.msra.mxu0 0
        %330 = vmatprep.subr.bf16.mxu0 0
        %331 = vmatpush1.bf16.msra.mxu0 0
        %332 = vmatprep.mubr.bf16.mxu0 0
        %333 = vmatmul.mubr.bf16.gmra.mrb[0].mxu0 %v292
        %v334 = vpop.f32.mrb[0].mxu0
        %v335 = vadd.f32 0.0, %v334
        %v336 = vpop.f32.mrb[0].mxu0
        %v337 = vpop.f32.mrb[0].mxu0
        %v338 = vadd.f32 0.0, %v337
        %v339 = vpop.f32.mrb[0].mxu0
        %340 = vmatprep.mubr.bf16.mxu0 0
        %341 = vmatmul.mubr.bf16.gmra.mrb[0].mxu0 %v295
        %v342 = vpop.f32.mrb[0].mxu0
        %v343 = vadd.f32 0.0, %v342
        %v344 = vpop.f32.mrb[0].mxu0
        %v345 = vpop.f32.mrb[0].mxu0
        %v346 = vadd.f32 0.0, %v345
        %v347 = vpop.f32.mrb[0].mxu0
        %348 = vmatprep.mubr.bf16.mxu0 0
        %349 = vmatmul.mubr.bf16.gmra.mrb[0].mxu0 %v298
        %v350 = vpop.f32.mrb[0].mxu0
        %v351 = vadd.f32 0.0, %v350
        %v352 = vpop.f32.mrb[0].mxu0
        %v353 = vpop.f32.mrb[0].mxu0
        %v354 = vadd.f32 0.0, %v353
        %v355 = vpop.f32.mrb[0].mxu0
        %356 = vdwg.mxu0
        %v363 = vunpack.c.l.b16 %v209
        %v364 = vunpack.c.l.b16 %v210
        %v365 = vunpack.c.l.b16 %v211
        %v366 = vunpack.c.l.b16 %v212
        %v367 = vunpack.c.l.b16 %v213
        %v368 = vunpack.c.l.b16 %v214
        %v369 = vpack.c.b16 %v364, %v363
        %v370 = vpack.c.b16 %v366, %v365
        %v371 = vpack.c.b16 %v368, %v367
        %375 = vmatprep.subr.bf16.mxu0 0
        %376 = vmatpush1.bf16.msra.mxu0 %v369
        %377 = vmatprep.subr.bf16.mxu0 0
        %378 = vmatpush1.bf16.msra.mxu0 %v370
        %379 = vmatprep.subr.bf16.mxu0 0
        %380 = vmatpush1.bf16.msra.mxu0 %v371
        %381 = vmatprep.subr.bf16.mxu0 0
        %382 = vmatpush1.bf16.msra.mxu0 0
        %383 = vmatprep.subr.bf16.mxu0 0
        %384 = vmatpush1.bf16.msra.mxu0 0
        %385 = vmatprep.subr.bf16.mxu0 0
        %386 = vmatpush1.bf16.msra.mxu0 0
        %387 = vmatprep.subr.bf16.mxu0 0
        %388 = vmatpush1.bf16.msra.mxu0 0
        %389 = vmatprep.subr.bf16.mxu0 0
        %390 = vmatpush1.bf16.msra.mxu0 0
        %391 = vmatprep.subr.bf16.mxu0 0
        %392 = vmatpush1.bf16.msra.mxu0 0
        %393 = vmatprep.subr.bf16.mxu0 0
        %394 = vmatpush1.bf16.msra.mxu0 0
        %395 = vmatprep.subr.bf16.mxu0 0
        %396 = vmatpush1.bf16.msra.mxu0 0
        %397 = vmatprep.subr.bf16.mxu0 0
        %398 = vmatpush1.bf16.msra.mxu0 0
        %399 = vmatprep.subr.bf16.mxu0 0
        %400 = vmatpush1.bf16.msra.mxu0 0
        %401 = vmatprep.subr.bf16.mxu0 0
        %402 = vmatpush1.bf16.msra.mxu0 0
        %403 = vmatprep.subr.bf16.mxu0 0
        %404 = vmatpush1.bf16.msra.mxu0 0
        %405 = vmatprep.subr.bf16.mxu0 0
        %406 = vmatpush1.bf16.msra.mxu0 0
        %407 = vmatprep.mubr.bf16.mxu0 0
        %408 = vmatmul.mubr.bf16.gmra.mrb[0].mxu0 %v292
        %v409 = vpop.f32.mrb[0].mxu0
        %v410 = vadd.f32 0.0, %v409
        %v411 = vpop.f32.mrb[0].mxu0
        %v412 = vpop.f32.mrb[0].mxu0
        %v413 = vadd.f32 0.0, %v412
        %v414 = vpop.f32.mrb[0].mxu0
        %415 = vmatprep.mubr.bf16.mxu0 0
        %416 = vmatmul.mubr.bf16.gmra.mrb[0].mxu0 %v295
        %v417 = vpop.f32.mrb[0].mxu0
        %v418 = vadd.f32 0.0, %v417
        %v419 = vpop.f32.mrb[0].mxu0
        %v420 = vpop.f32.mrb[0].mxu0
        %v421 = vadd.f32 0.0, %v420
        %v422 = vpop.f32.mrb[0].mxu0
        %423 = vmatprep.mubr.bf16.mxu0 0
        %424 = vmatmul.mubr.bf16.gmra.mrb[0].mxu0 %v298
        %v425 = vpop.f32.mrb[0].mxu0
        %v426 = vadd.f32 0.0, %v425
        %v427 = vpop.f32.mrb[0].mxu0
        %v428 = vpop.f32.mrb[0].mxu0
        %v429 = vadd.f32 0.0, %v428
        %v430 = vpop.f32.mrb[0].mxu0
        %431 = vdwg.mxu0
        %v438 = vunpack.c.l.b16 %v215
        %v439 = vunpack.c.l.b16 %v216
        %v440 = vunpack.c.l.b16 %v217
        %v441 = vunpack.c.l.b16 %v218
        %v442 = vunpack.c.l.b16 %v219
        %v443 = vunpack.c.l.b16 %v220
        %v444 = vpack.c.b16 %v439, %v438
        %v445 = vpack.c.b16 %v441, %v440
        %v446 = vpack.c.b16 %v443, %v442
        %450 = vmatprep.subr.bf16.mxu0 0
        %451 = vmatpush1.bf16.msra.mxu0 %v444
        %452 = vmatprep.subr.bf16.mxu0 0
        %453 = vmatpush1.bf16.msra.mxu0 %v445
        %454 = vmatprep.subr.bf16.mxu0 0
        %455 = vmatpush1.bf16.msra.mxu0 %v446
        %456 = vmatprep.subr.bf16.mxu0 0
        %457 = vmatpush1.bf16.msra.mxu0 0
        %458 = vmatprep.subr.bf16.mxu0 0
        %459 = vmatpush1.bf16.msra.mxu0 0
        %460 = vmatprep.subr.bf16.mxu0 0
        %461 = vmatpush1.bf16.msra.mxu0 0
        %462 = vmatprep.subr.bf16.mxu0 0
        %463 = vmatpush1.bf16.msra.mxu0 0
        %464 = vmatprep.subr.bf16.mxu0 0
        %465 = vmatpush1.bf16.msra.mxu0 0
        %466 = vmatprep.subr.bf16.mxu0 0
        %467 = vmatpush1.bf16.msra.mxu0 0
        %468 = vmatprep.subr.bf16.mxu0 0
        %469 = vmatpush1.bf16.msra.mxu0 0
        %470 = vmatprep.subr.bf16.mxu0 0
        %471 = vmatpush1.bf16.msra.mxu0 0
        %472 = vmatprep.subr.bf16.mxu0 0
        %473 = vmatpush1.bf16.msra.mxu0 0
        %474 = vmatprep.subr.bf16.mxu0 0
        %475 = vmatpush1.bf16.msra.mxu0 0
        %476 = vmatprep.subr.bf16.mxu0 0
        %477 = vmatpush1.bf16.msra.mxu0 0
        %478 = vmatprep.subr.bf16.mxu0 0
        %479 = vmatpush1.bf16.msra.mxu0 0
        %480 = vmatprep.subr.bf16.mxu0 0
        %481 = vmatpush1.bf16.msra.mxu0 0
        %482 = vmatprep.mubr.bf16.mxu0 0
        %483 = vmatmul.mubr.bf16.gmra.mrb[0].mxu0 %v292
        %v484 = vpop.f32.mrb[0].mxu0
        %v485 = vadd.f32 0.0, %v484
        %v486 = vpop.f32.mrb[0].mxu0
        %v487 = vpop.f32.mrb[0].mxu0
        %v488 = vadd.f32 0.0, %v487
        %v489 = vpop.f32.mrb[0].mxu0
        %490 = vmatprep.mubr.bf16.mxu0 0
        %491 = vmatmul.mubr.bf16.gmra.mrb[0].mxu0 %v295
        %v492 = vpop.f32.mrb[0].mxu0
        %v493 = vadd.f32 0.0, %v492
        %v494 = vpop.f32.mrb[0].mxu0
        %v495 = vpop.f32.mrb[0].mxu0
        %v496 = vadd.f32 0.0, %v495
        %v497 = vpop.f32.mrb[0].mxu0
        %498 = vmatprep.mubr.bf16.mxu0 0
        %499 = vmatmul.mubr.bf16.gmra.mrb[0].mxu0 %v298
        %v500 = vpop.f32.mrb[0].mxu0
        %v501 = vadd.f32 0.0, %v500
        %v502 = vpop.f32.mrb[0].mxu0
        %v503 = vpop.f32.mrb[0].mxu0
        %v504 = vadd.f32 0.0, %v503
        %v505 = vpop.f32.mrb[0].mxu0
        %506 = vdwg.mxu0
        %v513 = vunpack.c.l.b16 %v221
        %v514 = vunpack.c.l.b16 %v222
        %v515 = vunpack.c.l.b16 %v223
        %v516 = vunpack.c.l.b16 %v224
        %v517 = vunpack.c.l.b16 %v225
        %v518 = vunpack.c.l.b16 %v226
        %v519 = vpack.c.b16 %v514, %v513
        %v520 = vpack.c.b16 %v516, %v515
        %v521 = vpack.c.b16 %v518, %v517
        %525 = vmatprep.subr.bf16.mxu0 0
        %526 = vmatpush1.bf16.msra.mxu0 %v519
        %527 = vmatprep.subr.bf16.mxu0 0
        %528 = vmatpush1.bf16.msra.mxu0 %v520
        %529 = vmatprep.subr.bf16.mxu0 0
        %530 = vmatpush1.bf16.msra.mxu0 %v521
        %531 = vmatprep.subr.bf16.mxu0 0
        %532 = vmatpush1.bf16.msra.mxu0 0
        %533 = vmatprep.subr.bf16.mxu0 0
        %534 = vmatpush1.bf16.msra.mxu0 0
        %535 = vmatprep.subr.bf16.mxu0 0
        %536 = vmatpush1.bf16.msra.mxu0 0
        %537 = vmatprep.subr.bf16.mxu0 0
        %538 = vmatpush1.bf16.msra.mxu0 0
        %539 = vmatprep.subr.bf16.mxu0 0
        %540 = vmatpush1.bf16.msra.mxu0 0
        %541 = vmatprep.subr.bf16.mxu0 0
        %542 = vmatpush1.bf16.msra.mxu0 0
        %543 = vmatprep.subr.bf16.mxu0 0
        %544 = vmatpush1.bf16.msra.mxu0 0
        %545 = vmatprep.subr.bf16.mxu0 0
        %546 = vmatpush1.bf16.msra.mxu0 0
        %547 = vmatprep.subr.bf16.mxu0 0
        %548 = vmatpush1.bf16.msra.mxu0 0
        %549 = vmatprep.subr.bf16.mxu0 0
        %550 = vmatpush1.bf16.msra.mxu0 0
        %551 = vmatprep.subr.bf16.mxu0 0
        %552 = vmatpush1.bf16.msra.mxu0 0
        %553 = vmatprep.subr.bf16.mxu0 0
        %554 = vmatpush1.bf16.msra.mxu0 0
        %555 = vmatprep.subr.bf16.mxu0 0
        %556 = vmatpush1.bf16.msra.mxu0 0
        %557 = vmatprep.mubr.bf16.mxu0 0
        %558 = vmatmul.mubr.bf16.gmra.mrb[0].mxu0 %v292
        %v559 = vpop.f32.mrb[0].mxu0
        %v560 = vadd.f32 0.0, %v559
        %v561 = vpop.f32.mrb[0].mxu0
        %v562 = vpop.f32.mrb[0].mxu0
        %v563 = vadd.f32 0.0, %v562
        %v564 = vpop.f32.mrb[0].mxu0
        %565 = vmatprep.mubr.bf16.mxu0 0
        %566 = vmatmul.mubr.bf16.gmra.mrb[0].mxu0 %v295
        %v567 = vpop.f32.mrb[0].mxu0
        %v568 = vadd.f32 0.0, %v567
        %v569 = vpop.f32.mrb[0].mxu0
        %v570 = vpop.f32.mrb[0].mxu0
        %v571 = vadd.f32 0.0, %v570
        %v572 = vpop.f32.mrb[0].mxu0
        %573 = vmatprep.mubr.bf16.mxu0 0
        %574 = vmatmul.mubr.bf16.gmra.mrb[0].mxu0 %v298
        %v575 = vpop.f32.mrb[0].mxu0
        %v576 = vadd.f32 0.0, %v575
        %v577 = vpop.f32.mrb[0].mxu0
        %v578 = vpop.f32.mrb[0].mxu0
        %v579 = vadd.f32 0.0, %v578
        %v580 = vpop.f32.mrb[0].mxu0
        %581 = vdwg.mxu0
        %v588 = vunpack.c.l.b16 %v227
        %v589 = vunpack.c.l.b16 %v228
        %v590 = vunpack.c.l.b16 %v229
        %v591 = vunpack.c.l.b16 %v230
        %v592 = vunpack.c.l.b16 %v231
        %v593 = vunpack.c.l.b16 %v232
        %v594 = vpack.c.b16 %v589, %v588
        %v595 = vpack.c.b16 %v591, %v590
        %v596 = vpack.c.b16 %v593, %v592
        %600 = vmatprep.subr.bf16.mxu0 0
        %601 = vmatpush1.bf16.msra.mxu0 %v594
        %602 = vmatprep.subr.bf16.mxu0 0
        %603 = vmatpush1.bf16.msra.mxu0 %v595
        %604 = vmatprep.subr.bf16.mxu0 0
        %605 = vmatpush1.bf16.msra.mxu0 %v596
        %606 = vmatprep.subr.bf16.mxu0 0
        %607 = vmatpush1.bf16.msra.mxu0 0
        %608 = vmatprep.subr.bf16.mxu0 0
        %609 = vmatpush1.bf16.msra.mxu0 0
        %610 = vmatprep.subr.bf16.mxu0 0
        %611 = vmatpush1.bf16.msra.mxu0 0
        %612 = vmatprep.subr.bf16.mxu0 0
        %613 = vmatpush1.bf16.msra.mxu0 0
        %614 = vmatprep.subr.bf16.mxu0 0
        %615 = vmatpush1.bf16.msra.mxu0 0
        %616 = vmatprep.subr.bf16.mxu0 0
        %617 = vmatpush1.bf16.msra.mxu0 0
        %618 = vmatprep.subr.bf16.mxu0 0
        %619 = vmatpush1.bf16.msra.mxu0 0
        %620 = vmatprep.subr.bf16.mxu0 0
        %621 = vmatpush1.bf16.msra.mxu0 0
        %622 = vmatprep.subr.bf16.mxu0 0
        %623 = vmatpush1.bf16.msra.mxu0 0
        %624 = vmatprep.subr.bf16.mxu0 0
        %625 = vmatpush1.bf16.msra.mxu0 0
        %626 = vmatprep.subr.bf16.mxu0 0
        %627 = vmatpush1.bf16.msra.mxu0 0
        %628 = vmatprep.subr.bf16.mxu0 0
        %629 = vmatpush1.bf16.msra.mxu0 0
        %630 = vmatprep.subr.bf16.mxu0 0
        %631 = vmatpush1.bf16.msra.mxu0 0
        %632 = vmatprep.mubr.bf16.mxu0 0
        %633 = vmatmul.mubr.bf16.gmra.mrb[0].mxu0 %v292
        %v634 = vpop.f32.mrb[0].mxu0
        %v635 = vadd.f32 0.0, %v634
        %v636 = vpop.f32.mrb[0].mxu0
        %v637 = vpop.f32.mrb[0].mxu0
        %v638 = vadd.f32 0.0, %v637
        %v639 = vpop.f32.mrb[0].mxu0
        %640 = vmatprep.mubr.bf16.mxu0 0
        %641 = vmatmul.mubr.bf16.gmra.mrb[0].mxu0 %v295
        %v642 = vpop.f32.mrb[0].mxu0
        %v643 = vadd.f32 0.0, %v642
        %v644 = vpop.f32.mrb[0].mxu0
        %v645 = vpop.f32.mrb[0].mxu0
        %v646 = vadd.f32 0.0, %v645
        %v647 = vpop.f32.mrb[0].mxu0
        %648 = vmatprep.mubr.bf16.mxu0 0
        %649 = vmatmul.mubr.bf16.gmra.mrb[0].mxu0 %v298
        %v650 = vpop.f32.mrb[0].mxu0
        %v651 = vadd.f32 0.0, %v650
        %v652 = vpop.f32.mrb[0].mxu0
        %v653 = vpop.f32.mrb[0].mxu0
        %v654 = vadd.f32 0.0, %v653
        %v655 = vpop.f32.mrb[0].mxu0
        %656 = vdwg.mxu0
        %v663 = vunpack.c.l.b16 %v233
        %v664 = vunpack.c.l.b16 %v234
        %v665 = vunpack.c.l.b16 %v235
        %v666 = vunpack.c.l.b16 %v236
        %v667 = vunpack.c.l.b16 %v237
        %v668 = vunpack.c.l.b16 %v238
        %v669 = vpack.c.b16 %v664, %v663
        %v670 = vpack.c.b16 %v666, %v665
        %v671 = vpack.c.b16 %v668, %v667
        %675 = vmatprep.subr.bf16.mxu0 0
        %676 = vmatpush1.bf16.msra.mxu0 %v669
        %677 = vmatprep.subr.bf16.mxu0 0
        %678 = vmatpush1.bf16.msra.mxu0 %v670
        %679 = vmatprep.subr.bf16.mxu0 0
        %680 = vmatpush1.bf16.msra.mxu0 %v671
        %681 = vmatprep.subr.bf16.mxu0 0
        %682 = vmatpush1.bf16.msra.mxu0 0
        %683 = vmatprep.subr.bf16.mxu0 0
        %684 = vmatpush1.bf16.msra.mxu0 0
        %685 = vmatprep.subr.bf16.mxu0 0
        %686 = vmatpush1.bf16.msra.mxu0 0
        %687 = vmatprep.subr.bf16.mxu0 0
        %688 = vmatpush1.bf16.msra.mxu0 0
        %689 = vmatprep.subr.bf16.mxu0 0
        %690 = vmatpush1.bf16.msra.mxu0 0
        %691 = vmatprep.subr.bf16.mxu0 0
        %692 = vmatpush1.bf16.msra.mxu0 0
        %693 = vmatprep.subr.bf16.mxu0 0
        %694 = vmatpush1.bf16.msra.mxu0 0
        %695 = vmatprep.subr.bf16.mxu0 0
        %696 = vmatpush1.bf16.msra.mxu0 0
        %697 = vmatprep.subr.bf16.mxu0 0
        %698 = vmatpush1.bf16.msra.mxu0 0
        %699 = vmatprep.subr.bf16.mxu0 0
        %700 = vmatpush1.bf16.msra.mxu0 0
        %701 = vmatprep.subr.bf16.mxu0 0
        %702 = vmatpush1.bf16.msra.mxu0 0
        %703 = vmatprep.subr.bf16.mxu0 0
        %704 = vmatpush1.bf16.msra.mxu0 0
        %705 = vmatprep.subr.bf16.mxu0 0
        %706 = vmatpush1.bf16.msra.mxu0 0
        %707 = vmatprep.mubr.bf16.mxu0 0
        %708 = vmatmul.mubr.bf16.gmra.mrb[0].mxu0 %v292
        %v709 = vpop.f32.mrb[0].mxu0
        %v710 = vadd.f32 0.0, %v709
        %v711 = vpop.f32.mrb[0].mxu0
        %v712 = vpop.f32.mrb[0].mxu0
        %v713 = vadd.f32 0.0, %v712
        %v714 = vpop.f32.mrb[0].mxu0
        %715 = vmatprep.mubr.bf16.mxu0 0
        %716 = vmatmul.mubr.bf16.gmra.mrb[0].mxu0 %v295
        %v717 = vpop.f32.mrb[0].mxu0
        %v718 = vadd.f32 0.0, %v717
        %v719 = vpop.f32.mrb[0].mxu0
        %v720 = vpop.f32.mrb[0].mxu0
        %v721 = vadd.f32 0.0, %v720
        %v722 = vpop.f32.mrb[0].mxu0
        %723 = vmatprep.mubr.bf16.mxu0 0
        %724 = vmatmul.mubr.bf16.gmra.mrb[0].mxu0 %v298
        %v725 = vpop.f32.mrb[0].mxu0
        %v726 = vadd.f32 0.0, %v725
        %v727 = vpop.f32.mrb[0].mxu0
        %v728 = vpop.f32.mrb[0].mxu0
        %v729 = vadd.f32 0.0, %v728
        %v730 = vpop.f32.mrb[0].mxu0
        %731 = vdwg.mxu0
        %v738 = vunpack.c.l.b16 %v239
        %v739 = vunpack.c.l.b16 %v240
        %v740 = vunpack.c.l.b16 %v241
        %v741 = vunpack.c.l.b16 %v242
        %v742 = vunpack.c.l.b16 %v243
        %v743 = vunpack.c.l.b16 %v244
        %v744 = vpack.c.b16 %v739, %v738
        %v745 = vpack.c.b16 %v741, %v740
        %v746 = vpack.c.b16 %v743, %v742
        %750 = vmatprep.subr.bf16.mxu0 0
        %751 = vmatpush1.bf16.msra.mxu0 %v744
        %752 = vmatprep.subr.bf16.mxu0 0
        %753 = vmatpush1.bf16.msra.mxu0 %v745
        %754 = vmatprep.subr.bf16.mxu0 0
        %755 = vmatpush1.bf16.msra.mxu0 %v746
        %756 = vmatprep.subr.bf16.mxu0 0
        %757 = vmatpush1.bf16.msra.mxu0 0
        %758 = vmatprep.subr.bf16.mxu0 0
        %759 = vmatpush1.bf16.msra.mxu0 0
        %760 = vmatprep.subr.bf16.mxu0 0
        %761 = vmatpush1.bf16.msra.mxu0 0
        %762 = vmatprep.subr.bf16.mxu0 0
        %763 = vmatpush1.bf16.msra.mxu0 0
        %764 = vmatprep.subr.bf16.mxu0 0
        %765 = vmatpush1.bf16.msra.mxu0 0
        %766 = vmatprep.subr.bf16.mxu0 0
        %767 = vmatpush1.bf16.msra.mxu0 0
        %768 = vmatprep.subr.bf16.mxu0 0
        %769 = vmatpush1.bf16.msra.mxu0 0
        %770 = vmatprep.subr.bf16.mxu0 0
        %771 = vmatpush1.bf16.msra.mxu0 0
        %772 = vmatprep.subr.bf16.mxu0 0
        %773 = vmatpush1.bf16.msra.mxu0 0
        %774 = vmatprep.subr.bf16.mxu0 0
        %775 = vmatpush1.bf16.msra.mxu0 0
        %776 = vmatprep.subr.bf16.mxu0 0
        %777 = vmatpush1.bf16.msra.mxu0 0
        %778 = vmatprep.subr.bf16.mxu0 0
        %779 = vmatpush1.bf16.msra.mxu0 0
        %780 = vmatprep.subr.bf16.mxu0 0
        %781 = vmatpush1.bf16.msra.mxu0 0
        %782 = vmatprep.mubr.bf16.mxu0 0
        %783 = vmatmul.mubr.bf16.gmra.mrb[0].mxu0 %v292
        %v784 = vpop.f32.mrb[0].mxu0
        %v785 = vadd.f32 0.0, %v784
        %v786 = vpop.f32.mrb[0].mxu0
        %v787 = vpop.f32.mrb[0].mxu0
        %v788 = vadd.f32 0.0, %v787
        %v789 = vpop.f32.mrb[0].mxu0
        %790 = vmatprep.mubr.bf16.mxu0 0
        %791 = vmatmul.mubr.bf16.gmra.mrb[0].mxu0 %v295
        %v792 = vpop.f32.mrb[0].mxu0
        %v793 = vadd.f32 0.0, %v792
        %v794 = vpop.f32.mrb[0].mxu0
        %v795 = vpop.f32.mrb[0].mxu0
        %v796 = vadd.f32 0.0, %v795
        %v797 = vpop.f32.mrb[0].mxu0
        %798 = vmatprep.mubr.bf16.mxu0 0
        %799 = vmatmul.mubr.bf16.gmra.mrb[0].mxu0 %v298
        %v800 = vpop.f32.mrb[0].mxu0
        %v801 = vadd.f32 0.0, %v800
        %v802 = vpop.f32.mrb[0].mxu0
        %v803 = vpop.f32.mrb[0].mxu0
        %v804 = vadd.f32 0.0, %v803
        %v805 = vpop.f32.mrb[0].mxu0
        %806 = vdwg.mxu0
        %v813 = vunpack.c.l.b16 %v245
        %v814 = vunpack.c.l.b16 %v246
        %v815 = vunpack.c.l.b16 %v247
        %v816 = vunpack.c.l.b16 %v248
        %v817 = vunpack.c.l.b16 %v249
        %v818 = vunpack.c.l.b16 %v250
        %v819 = vpack.c.b16 %v814, %v813
        %v820 = vpack.c.b16 %v816, %v815
        %v821 = vpack.c.b16 %v818, %v817
        %825 = vmatprep.subr.bf16.mxu0 0
        %826 = vmatpush1.bf16.msra.mxu0 %v819
        %827 = vmatprep.subr.bf16.mxu0 0
        %828 = vmatpush1.bf16.msra.mxu0 %v820
        %829 = vmatprep.subr.bf16.mxu0 0
        %830 = vmatpush1.bf16.msra.mxu0 %v821
        %831 = vmatprep.subr.bf16.mxu0 0
        %832 = vmatpush1.bf16.msra.mxu0 0
        %833 = vmatprep.subr.bf16.mxu0 0
        %834 = vmatpush1.bf16.msra.mxu0 0
        %835 = vmatprep.subr.bf16.mxu0 0
        %836 = vmatpush1.bf16.msra.mxu0 0
        %837 = vmatprep.subr.bf16.mxu0 0
        %838 = vmatpush1.bf16.msra.mxu0 0
        %839 = vmatprep.subr.bf16.mxu0 0
        %840 = vmatpush1.bf16.msra.mxu0 0
        %841 = vmatprep.subr.bf16.mxu0 0
        %842 = vmatpush1.bf16.msra.mxu0 0
        %843 = vmatprep.subr.bf16.mxu0 0
        %844 = vmatpush1.bf16.msra.mxu0 0
        %845 = vmatprep.subr.bf16.mxu0 0
        %846 = vmatpush1.bf16.msra.mxu0 0
        %847 = vmatprep.subr.bf16.mxu0 0
        %848 = vmatpush1.bf16.msra.mxu0 0
        %849 = vmatprep.subr.bf16.mxu0 0
        %850 = vmatpush1.bf16.msra.mxu0 0
        %851 = vmatprep.subr.bf16.mxu0 0
        %852 = vmatpush1.bf16.msra.mxu0 0
        %853 = vmatprep.subr.bf16.mxu0 0
        %854 = vmatpush1.bf16.msra.mxu0 0
        %855 = vmatprep.subr.bf16.mxu0 0
        %856 = vmatpush1.bf16.msra.mxu0 0
        %857 = vmatprep.mubr.bf16.mxu0 0
        %858 = vmatmul.mubr.bf16.gmra.mrb[0].mxu0 %v292
        %v859 = vpop.f32.mrb[0].mxu0
        %v860 = vadd.f32 0.0, %v859
        %v861 = vpop.f32.mrb[0].mxu0
        %v862 = vpop.f32.mrb[0].mxu0
        %v863 = vadd.f32 0.0, %v862
        %v864 = vpop.f32.mrb[0].mxu0
        %865 = vmatprep.mubr.bf16.mxu0 0
        %866 = vmatmul.mubr.bf16.gmra.mrb[0].mxu0 %v295
        %v867 = vpop.f32.mrb[0].mxu0
        %v868 = vadd.f32 0.0, %v867
        %v869 = vpop.f32.mrb[0].mxu0
        %v870 = vpop.f32.mrb[0].mxu0
        %v871 = vadd.f32 0.0, %v870
        %v872 = vpop.f32.mrb[0].mxu0
        %873 = vmatprep.mubr.bf16.mxu0 0
        %874 = vmatmul.mubr.bf16.gmra.mrb[0].mxu0 %v298
        %v875 = vpop.f32.mrb[0].mxu0
        %v876 = vadd.f32 0.0, %v875
        %v877 = vpop.f32.mrb[0].mxu0
        %v878 = vpop.f32.mrb[0].mxu0
        %v879 = vadd.f32 0.0, %v878
        %v880 = vpop.f32.mrb[0].mxu0
        %881 = vdwg.mxu0
        %v882 = vpack.c.bf16 %v338, %v335
        %v883 = vpack.c.bf16 %v346, %v343
        %v884 = vpack.c.bf16 %v354, %v351
        %v885 = vpack.c.bf16 %v413, %v410
        %v886 = vpack.c.bf16 %v421, %v418
        %v887 = vpack.c.bf16 %v429, %v426
        %v888 = vpack.c.bf16 %v488, %v485
        %v889 = vpack.c.bf16 %v496, %v493
        %v890 = vpack.c.bf16 %v504, %v501
        %v891 = vpack.c.bf16 %v563, %v560
        %v892 = vpack.c.bf16 %v571, %v568
        %v893 = vpack.c.bf16 %v579, %v576
        %v894 = vpack.c.bf16 %v638, %v635
        %v895 = vpack.c.bf16 %v646, %v643
        %v896 = vpack.c.bf16 %v654, %v651
        %v897 = vpack.c.bf16 %v713, %v710
        %v898 = vpack.c.bf16 %v721, %v718
        %v899 = vpack.c.bf16 %v729, %v726
        %v900 = vpack.c.bf16 %v788, %v785
        %v901 = vpack.c.bf16 %v796, %v793
        %v902 = vpack.c.bf16 %v804, %v801
        %v903 = vpack.c.bf16 %v863, %v860
        %v904 = vpack.c.bf16 %v871, %v868
        %v905 = vpack.c.bf16 %v879, %v876
        %v906 = vld [vmem:[%s2] sm:$0xf]
        %v907 = vld [vmem:[%s2 + $0x4] sm:$0xf]
        %v908 = vld [vmem:[%s2 + $0x8] sm:$0xf]
        %v909 = vld [vmem:[%s2 + $0xc] sm:$0xf]
        %v910 = vld [vmem:[%s3] sm:$0x1]
        %v912 = vlaneseq
        %v913 = vshrl.u32 %v912, 7
        %v914 = vsub.s32 0, %v913
        %v915 = vrot.slane %v910, %v914
        %v921 = vunpack.c.l.b16 %v906
        %v922 = vunpack.c.l.b16 %v907
        %v923 = vunpack.c.l.b16 %v908
        %v924 = vunpack.c.l.b16 %v909
        %v925 = vpack.c.b16 %v922, %v921
        %v926 = vpack.c.b16 %v924, %v923
        %vm929 = vcmask 261120
        %v931 = vsel %vm929, %v882, 0
        %v934 = vsel %vm929, %v883, 0
        %v937 = vsel %vm929, %v884, 0
        %v940 = vsel %vm929, %v885, 0
        %v943 = vsel %vm929, %v886, 0
        %v946 = vsel %vm929, %v887, 0
        %v949 = vsel %vm929, %v888, 0
        %v952 = vsel %vm929, %v889, 0
        %v955 = vsel %vm929, %v890, 0
        %v958 = vsel %vm929, %v891, 0
        %v961 = vsel %vm929, %v892, 0
        %v964 = vsel %vm929, %v893, 0
        %v967 = vsel %vm929, %v894, 0
        %v970 = vsel %vm929, %v895, 0
        %v973 = vsel %vm929, %v896, 0
        %v976 = vsel %vm929, %v897, 0
        %v979 = vsel %vm929, %v898, 0
        %v982 = vsel %vm929, %v899, 0
        %v985 = vsel %vm929, %v900, 0
        %v988 = vsel %vm929, %v901, 0
        %v991 = vsel %vm929, %v902, 0
        %v994 = vsel %vm929, %v903, 0
        %v997 = vsel %vm929, %v904, 0
        %v1000 = vsel %vm929, %v905, 0
        %1002 = vmatprep.subr.bf16.mxu0 0
        %1003 = vmatpush1.bf16.msra.mxu0 %v925
        %1004 = vmatprep.subr.bf16.mxu0 0
        %1005 = vmatpush1.bf16.msra.mxu0 %v926
        %1006 = vmatprep.subr.bf16.mxu0 0
        %1007 = vmatpush1.bf16.msra.mxu0 0
        %1008 = vmatprep.subr.bf16.mxu0 0
        %1009 = vmatpush1.bf16.msra.mxu0 0
        %1010 = vmatprep.subr.bf16.mxu0 0
        %1011 = vmatpush1.bf16.msra.mxu0 0
        %1012 = vmatprep.subr.bf16.mxu0 0
        %1013 = vmatpush1.bf16.msra.mxu0 0
        %1014 = vmatprep.subr.bf16.mxu0 0
        %1015 = vmatpush1.bf16.msra.mxu0 0
        %1016 = vmatprep.subr.bf16.mxu0 0
        %1017 = vmatpush1.bf16.msra.mxu0 0
        %1018 = vmatprep.subr.bf16.mxu0 0
        %1019 = vmatpush1.bf16.msra.mxu0 0
        %1020 = vmatprep.subr.bf16.mxu0 0
        %1021 = vmatpush1.bf16.msra.mxu0 0
        %1022 = vmatprep.subr.bf16.mxu0 0
        %1023 = vmatpush1.bf16.msra.mxu0 0
        %1024 = vmatprep.subr.bf16.mxu0 0
        %1025 = vmatpush1.bf16.msra.mxu0 0
        %1026 = vmatprep.subr.bf16.mxu0 0
        %1027 = vmatpush1.bf16.msra.mxu0 0
        %1028 = vmatprep.subr.bf16.mxu0 0
        %1029 = vmatpush1.bf16.msra.mxu0 0
        %1030 = vmatprep.subr.bf16.mxu0 0
        %1031 = vmatpush1.bf16.msra.mxu0 0
        %1032 = vmatprep.subr.bf16.mxu0 0
        %1033 = vmatpush1.bf16.msra.mxu0 0
        %1034 = vmatprep.mubr.bf16.mxu0 0
        %1035 = vmatmul.mubr.bf16.gmra.mrb[0].mxu0 %v931
        %v1036 = vpop.f32.mrb[0].mxu0
        %v1037 = vadd.f32 %v915, %v1036
        %v1038 = vpop.f32.mrb[0].mxu0
        %v1039 = vpop.f32.mrb[0].mxu0
        %v1040 = vadd.f32 %v915, %v1039
        %v1041 = vpop.f32.mrb[0].mxu0
        %1042 = vmatprep.mubr.bf16.mxu0 0
        %1043 = vmatmul.mubr.bf16.gmra.mrb[0].mxu0 %v934
        %v1044 = vpop.f32.mrb[0].mxu0
        %v1045 = vadd.f32 %v915, %v1044
        %v1046 = vpop.f32.mrb[0].mxu0
        %v1047 = vpop.f32.mrb[0].mxu0
        %v1048 = vadd.f32 %v915, %v1047
        %v1049 = vpop.f32.mrb[0].mxu0
        %1050 = vmatprep.mubr.bf16.mxu0 0
        %1051 = vmatmul.mubr.bf16.gmra.mrb[0].mxu0 %v937
        %v1052 = vpop.f32.mrb[0].mxu0
        %v1053 = vadd.f32 %v915, %v1052
        %v1054 = vpop.f32.mrb[0].mxu0
        %v1055 = vpop.f32.mrb[0].mxu0
        %v1056 = vadd.f32 %v915, %v1055
        %v1057 = vpop.f32.mrb[0].mxu0
        %1058 = vmatprep.mubr.bf16.mxu0 0
        %1059 = vmatmul.mubr.bf16.gmra.mrb[0].mxu0 %v940
        %v1060 = vpop.f32.mrb[0].mxu0
        %v1061 = vadd.f32 %v915, %v1060
        %v1062 = vpop.f32.mrb[0].mxu0
        %v1063 = vpop.f32.mrb[0].mxu0
        %v1064 = vadd.f32 %v915, %v1063
        %v1065 = vpop.f32.mrb[0].mxu0
        %1066 = vmatprep.mubr.bf16.mxu0 0
        %1067 = vmatmul.mubr.bf16.gmra.mrb[0].mxu0 %v943
        %v1068 = vpop.f32.mrb[0].mxu0
        %v1069 = vadd.f32 %v915, %v1068
        %v1070 = vpop.f32.mrb[0].mxu0
        %v1071 = vpop.f32.mrb[0].mxu0
        %v1072 = vadd.f32 %v915, %v1071
        %v1073 = vpop.f32.mrb[0].mxu0
        %1074 = vmatprep.mubr.bf16.mxu0 0
        %1075 = vmatmul.mubr.bf16.gmra.mrb[0].mxu0 %v946
        %v1076 = vpop.f32.mrb[0].mxu0
        %v1077 = vadd.f32 %v915, %v1076
        %v1078 = vpop.f32.mrb[0].mxu0
        %v1079 = vpop.f32.mrb[0].mxu0
        %v1080 = vadd.f32 %v915, %v1079
        %v1081 = vpop.f32.mrb[0].mxu0
        %1082 = vmatprep.mubr.bf16.mxu0 0
        %1083 = vmatmul.mubr.bf16.gmra.mrb[0].mxu0 %v949
        %v1084 = vpop.f32.mrb[0].mxu0
        %v1085 = vadd.f32 %v915, %v1084
        %v1086 = vpop.f32.mrb[0].mxu0
        %v1087 = vpop.f32.mrb[0].mxu0
        %v1088 = vadd.f32 %v915, %v1087
        %v1089 = vpop.f32.mrb[0].mxu0
        %1090 = vmatprep.mubr.bf16.mxu0 0
        %1091 = vmatmul.mubr.bf16.gmra.mrb[0].mxu0 %v952
        %v1092 = vpop.f32.mrb[0].mxu0
        %v1093 = vadd.f32 %v915, %v1092
        %v1094 = vpop.f32.mrb[0].mxu0
        %v1095 = vpop.f32.mrb[0].mxu0
        %v1096 = vadd.f32 %v915, %v1095
        %v1097 = vpop.f32.mrb[0].mxu0
        %1098 = vmatprep.mubr.bf16.mxu0 0
        %1099 = vmatmul.mubr.bf16.gmra.mrb[0].mxu0 %v955
        %v1100 = vpop.f32.mrb[0].mxu0
        %v1101 = vadd.f32 %v915, %v1100
        %v1102 = vpop.f32.mrb[0].mxu0
        %v1103 = vpop.f32.mrb[0].mxu0
        %v1104 = vadd.f32 %v915, %v1103
        %v1105 = vpop.f32.mrb[0].mxu0
        %1106 = vmatprep.mubr.bf16.mxu0 0
        %1107 = vmatmul.mubr.bf16.gmra.mrb[0].mxu0 %v958
        %v1108 = vpop.f32.mrb[0].mxu0
        %v1109 = vadd.f32 %v915, %v1108
        %v1110 = vpop.f32.mrb[0].mxu0
        %v1111 = vpop.f32.mrb[0].mxu0
        %v1112 = vadd.f32 %v915, %v1111
        %v1113 = vpop.f32.mrb[0].mxu0
        %1114 = vmatprep.mubr.bf16.mxu0 0
        %1115 = vmatmul.mubr.bf16.gmra.mrb[0].mxu0 %v961
        %v1116 = vpop.f32.mrb[0].mxu0
        %v1117 = vadd.f32 %v915, %v1116
        %v1118 = vpop.f32.mrb[0].mxu0
        %v1119 = vpop.f32.mrb[0].mxu0
        %v1120 = vadd.f32 %v915, %v1119
        %v1121 = vpop.f32.mrb[0].mxu0
        %1122 = vmatprep.mubr.bf16.mxu0 0
        %1123 = vmatmul.mubr.bf16.gmra.mrb[0].mxu0 %v964
        %v1124 = vpop.f32.mrb[0].mxu0
        %v1125 = vadd.f32 %v915, %v1124
        %v1126 = vpop.f32.mrb[0].mxu0
        %v1127 = vpop.f32.mrb[0].mxu0
        %v1128 = vadd.f32 %v915, %v1127
        %v1129 = vpop.f32.mrb[0].mxu0
        %1130 = vmatprep.mubr.bf16.mxu0 0
        %1131 = vmatmul.mubr.bf16.gmra.mrb[0].mxu0 %v967
        %v1132 = vpop.f32.mrb[0].mxu0
        %v1133 = vadd.f32 %v915, %v1132
        %v1134 = vpop.f32.mrb[0].mxu0
        %v1135 = vpop.f32.mrb[0].mxu0
        %v1136 = vadd.f32 %v915, %v1135
        %v1137 = vpop.f32.mrb[0].mxu0
        %1138 = vmatprep.mubr.bf16.mxu0 0
        %1139 = vmatmul.mubr.bf16.gmra.mrb[0].mxu0 %v970
        %v1140 = vpop.f32.mrb[0].mxu0
        %v1141 = vadd.f32 %v915, %v1140
        %v1142 = vpop.f32.mrb[0].mxu0
        %v1143 = vpop.f32.mrb[0].mxu0
        %v1144 = vadd.f32 %v915, %v1143
        %v1145 = vpop.f32.mrb[0].mxu0
        %1146 = vmatprep.mubr.bf16.mxu0 0
        %1147 = vmatmul.mubr.bf16.gmra.mrb[0].mxu0 %v973
        %v1148 = vpop.f32.mrb[0].mxu0
        %v1149 = vadd.f32 %v915, %v1148
        %v1150 = vpop.f32.mrb[0].mxu0
        %v1151 = vpop.f32.mrb[0].mxu0
        %v1152 = vadd.f32 %v915, %v1151
        %v1153 = vpop.f32.mrb[0].mxu0
        %1154 = vmatprep.mubr.bf16.mxu0 0
        %1155 = vmatmul.mubr.bf16.gmra.mrb[0].mxu0 %v976
        %v1156 = vpop.f32.mrb[0].mxu0
        %v1157 = vadd.f32 %v915, %v1156
        %v1158 = vpop.f32.mrb[0].mxu0
        %v1159 = vpop.f32.mrb[0].mxu0
        %v1160 = vadd.f32 %v915, %v1159
        %v1161 = vpop.f32.mrb[0].mxu0
        %1162 = vmatprep.mubr.bf16.mxu0 0
        %1163 = vmatmul.mubr.bf16.gmra.mrb[0].mxu0 %v979
        %v1164 = vpop.f32.mrb[0].mxu0
        %v1165 = vadd.f32 %v915, %v1164
        %v1166 = vpop.f32.mrb[0].mxu0
        %v1167 = vpop.f32.mrb[0].mxu0
        %v1168 = vadd.f32 %v915, %v1167
        %v1169 = vpop.f32.mrb[0].mxu0
        %1170 = vmatprep.mubr.bf16.mxu0 0
        %1171 = vmatmul.mubr.bf16.gmra.mrb[0].mxu0 %v982
        %v1172 = vpop.f32.mrb[0].mxu0
        %v1173 = vadd.f32 %v915, %v1172
        %v1174 = vpop.f32.mrb[0].mxu0
        %v1175 = vpop.f32.mrb[0].mxu0
        %v1176 = vadd.f32 %v915, %v1175
        %v1177 = vpop.f32.mrb[0].mxu0
        %1178 = vmatprep.mubr.bf16.mxu0 0
        %1179 = vmatmul.mubr.bf16.gmra.mrb[0].mxu0 %v985
        %v1180 = vpop.f32.mrb[0].mxu0
        %v1181 = vadd.f32 %v915, %v1180
        %v1182 = vpop.f32.mrb[0].mxu0
        %v1183 = vpop.f32.mrb[0].mxu0
        %v1184 = vadd.f32 %v915, %v1183
        %v1185 = vpop.f32.mrb[0].mxu0
        %1186 = vmatprep.mubr.bf16.mxu0 0
        %1187 = vmatmul.mubr.bf16.gmra.mrb[0].mxu0 %v988
        %v1188 = vpop.f32.mrb[0].mxu0
        %v1189 = vadd.f32 %v915, %v1188
        %v1190 = vpop.f32.mrb[0].mxu0
        %v1191 = vpop.f32.mrb[0].mxu0
        %v1192 = vadd.f32 %v915, %v1191
        %v1193 = vpop.f32.mrb[0].mxu0
        %1194 = vmatprep.mubr.bf16.mxu0 0
        %1195 = vmatmul.mubr.bf16.gmra.mrb[0].mxu0 %v991
        %v1196 = vpop.f32.mrb[0].mxu0
        %v1197 = vadd.f32 %v915, %v1196
        %v1198 = vpop.f32.mrb[0].mxu0
        %v1199 = vpop.f32.mrb[0].mxu0
        %v1200 = vadd.f32 %v915, %v1199
        %v1201 = vpop.f32.mrb[0].mxu0
        %1202 = vmatprep.mubr.bf16.mxu0 0
        %1203 = vmatmul.mubr.bf16.gmra.mrb[0].mxu0 %v994
        %v1204 = vpop.f32.mrb[0].mxu0
        %v1205 = vadd.f32 %v915, %v1204
        %v1206 = vpop.f32.mrb[0].mxu0
        %v1207 = vpop.f32.mrb[0].mxu0
        %v1208 = vadd.f32 %v915, %v1207
        %v1209 = vpop.f32.mrb[0].mxu0
        %1210 = vmatprep.mubr.bf16.mxu0 0
        %1211 = vmatmul.mubr.bf16.gmra.mrb[0].mxu0 %v997
        %v1212 = vpop.f32.mrb[0].mxu0
        %v1213 = vadd.f32 %v915, %v1212
        %v1214 = vpop.f32.mrb[0].mxu0
        %v1215 = vpop.f32.mrb[0].mxu0
        %v1216 = vadd.f32 %v915, %v1215
        %v1217 = vpop.f32.mrb[0].mxu0
        %1218 = vmatprep.mubr.bf16.mxu0 0
        %1219 = vmatmul.mubr.bf16.gmra.mrb[0].mxu0 %v1000
        %v1220 = vpop.f32.mrb[0].mxu0
        %v1221 = vadd.f32 %v915, %v1220
        %v1222 = vpop.f32.mrb[0].mxu0
        %v1223 = vpop.f32.mrb[0].mxu0
        %v1224 = vadd.f32 %v915, %v1223
        %v1225 = vpop.f32.mrb[0].mxu0
        %1226 = vdwg.mxu0
        %v1227 = vsub.f32 0.0, %v1037
        %v1228 = vsub.f32 0.0, %v1040
        %v1229 = vsub.f32 0.0, %v1045
        %v1230 = vsub.f32 0.0, %v1048
        %v1231 = vsub.f32 0.0, %v1053
        %v1232 = vsub.f32 0.0, %v1056
        %v1233 = vsub.f32 0.0, %v1061
        %v1234 = vsub.f32 0.0, %v1064
        %v1235 = vsub.f32 0.0, %v1069
        %v1236 = vsub.f32 0.0, %v1072
        %v1237 = vsub.f32 0.0, %v1077
        %v1238 = vsub.f32 0.0, %v1080
        %v1239 = vsub.f32 0.0, %v1085
        %v1240 = vsub.f32 0.0, %v1088
        %v1241 = vsub.f32 0.0, %v1093
        %v1242 = vsub.f32 0.0, %v1096
        %v1243 = vsub.f32 0.0, %v1101
        %v1244 = vsub.f32 0.0, %v1104
        %v1245 = vsub.f32 0.0, %v1109
        %v1246 = vsub.f32 0.0, %v1112
        %v1247 = vsub.f32 0.0, %v1117
        %v1248 = vsub.f32 0.0, %v1120
        %v1249 = vsub.f32 0.0, %v1125
        %v1250 = vsub.f32 0.0, %v1128
        %v1251 = vsub.f32 0.0, %v1133
        %v1252 = vsub.f32 0.0, %v1136
        %v1253 = vsub.f32 0.0, %v1141
        %v1254 = vsub.f32 0.0, %v1144
        %v1255 = vsub.f32 0.0, %v1149
        %v1256 = vsub.f32 0.0, %v1152
        %v1257 = vsub.f32 0.0, %v1157
        %v1258 = vsub.f32 0.0, %v1160
        %v1259 = vsub.f32 0.0, %v1165
        %v1260 = vsub.f32 0.0, %v1168
        %v1261 = vsub.f32 0.0, %v1173
        %v1262 = vsub.f32 0.0, %v1176
        %v1263 = vsub.f32 0.0, %v1181
        %v1264 = vsub.f32 0.0, %v1184
        %v1265 = vsub.f32 0.0, %v1189
        %v1266 = vsub.f32 0.0, %v1192
        %v1267 = vsub.f32 0.0, %v1197
        %v1268 = vsub.f32 0.0, %v1200
        %v1269 = vsub.f32 0.0, %v1205
        %v1270 = vsub.f32 0.0, %v1208
        %v1271 = vsub.f32 0.0, %v1213
        %v1272 = vsub.f32 0.0, %v1216
        %v1273 = vsub.f32 0.0, %v1221
        %v1274 = vsub.f32 0.0, %v1224
        %v1275 = vmul.f32 %v1227, 1.442695
        %v1276 = vpow.pop %v1275
        %v1277 = vmul.f32 %v1228, 1.442695
        %v1278 = vpow.pop %v1277
        %v1279 = vmul.f32 %v1229, 1.442695
        %v1280 = vpow.pop %v1279
        %v1281 = vmul.f32 %v1230, 1.442695
        %v1282 = vpow.pop %v1281
        %v1283 = vmul.f32 %v1231, 1.442695
        %v1284 = vpow.pop %v1283
        %v1285 = vmul.f32 %v1232, 1.442695
        %v1286 = vpow.pop %v1285
        %v1287 = vmul.f32 %v1233, 1.442695
        %v1288 = vpow.pop %v1287
        %v1289 = vmul.f32 %v1234, 1.442695
        %v1290 = vpow.pop %v1289
        %v1291 = vmul.f32 %v1235, 1.442695
        %v1292 = vpow.pop %v1291
        %v1293 = vmul.f32 %v1236, 1.442695
        %v1294 = vpow.pop %v1293
        %v1295 = vmul.f32 %v1237, 1.442695
        %v1296 = vpow.pop %v1295
        %v1297 = vmul.f32 %v1238, 1.442695
        %v1298 = vpow.pop %v1297
        %v1299 = vmul.f32 %v1239, 1.442695
        %v1300 = vpow.pop %v1299
        %v1301 = vmul.f32 %v1240, 1.442695
        %v1302 = vpow.pop %v1301
        %v1303 = vmul.f32 %v1241, 1.442695
        %v1304 = vpow.pop %v1303
        %v1305 = vmul.f32 %v1242, 1.442695
        %v1306 = vpow.pop %v1305
        %v1307 = vmul.f32 %v1243, 1.442695
        %v1308 = vpow.pop %v1307
        %v1309 = vmul.f32 %v1244, 1.442695
        %v1310 = vpow.pop %v1309
        %v1311 = vmul.f32 %v1245, 1.442695
        %v1312 = vpow.pop %v1311
        %v1313 = vmul.f32 %v1246, 1.442695
        %v1314 = vpow.pop %v1313
        %v1315 = vmul.f32 %v1247, 1.442695
        %v1316 = vpow.pop %v1315
        %v1317 = vmul.f32 %v1248, 1.442695
        %v1318 = vpow.pop %v1317
        %v1319 = vmul.f32 %v1249, 1.442695
        %v1320 = vpow.pop %v1319
        %v1321 = vmul.f32 %v1250, 1.442695
        %v1322 = vpow.pop %v1321
        %v1323 = vmul.f32 %v1251, 1.442695
        %v1324 = vpow.pop %v1323
        %v1325 = vmul.f32 %v1252, 1.442695
        %v1326 = vpow.pop %v1325
        %v1327 = vmul.f32 %v1253, 1.442695
        %v1328 = vpow.pop %v1327
        %v1329 = vmul.f32 %v1254, 1.442695
        %v1330 = vpow.pop %v1329
        %v1331 = vmul.f32 %v1255, 1.442695
        %v1332 = vpow.pop %v1331
        %v1333 = vmul.f32 %v1256, 1.442695
        %v1334 = vpow.pop %v1333
        %v1335 = vmul.f32 %v1257, 1.442695
        %v1336 = vpow.pop %v1335
        %v1337 = vmul.f32 %v1258, 1.442695
        %v1338 = vpow.pop %v1337
        %v1339 = vmul.f32 %v1259, 1.442695
        %v1340 = vpow.pop %v1339
        %v1341 = vmul.f32 %v1260, 1.442695
        %v1342 = vpow.pop %v1341
        %v1343 = vmul.f32 %v1261, 1.442695
        %v1344 = vpow.pop %v1343
        %v1345 = vmul.f32 %v1262, 1.442695
        %v1346 = vpow.pop %v1345
        %v1347 = vmul.f32 %v1263, 1.442695
        %v1348 = vpow.pop %v1347
        %v1349 = vmul.f32 %v1264, 1.442695
        %v1350 = vpow.pop %v1349
        %v1351 = vmul.f32 %v1265, 1.442695
        %v1352 = vpow.pop %v1351
        %v1353 = vmul.f32 %v1266, 1.442695
        %v1354 = vpow.pop %v1353
        %v1355 = vmul.f32 %v1267, 1.442695
        %v1356 = vpow.pop %v1355
        %v1357 = vmul.f32 %v1268, 1.442695
        %v1358 = vpow.pop %v1357
        %v1359 = vmul.f32 %v1269, 1.442695
        %v1360 = vpow.pop %v1359
        %v1361 = vmul.f32 %v1270, 1.442695
        %v1362 = vpow.pop %v1361
        %v1363 = vmul.f32 %v1271, 1.442695
        %v1364 = vpow.pop %v1363
        %v1365 = vmul.f32 %v1272, 1.442695
        %v1366 = vpow.pop %v1365
        %v1367 = vmul.f32 %v1273, 1.442695
        %v1368 = vpow.pop %v1367
        %v1369 = vmul.f32 %v1274, 1.442695
        %v1370 = vpow.pop %v1369
        %v1371 = vadd.f32 %v1276, 1.0
        %v1372 = vadd.f32 %v1278, 1.0
        %v1373 = vadd.f32 %v1280, 1.0
        %v1374 = vadd.f32 %v1282, 1.0
        %v1375 = vadd.f32 %v1284, 1.0
        %v1376 = vadd.f32 %v1286, 1.0
        %v1377 = vadd.f32 %v1288, 1.0
        %v1378 = vadd.f32 %v1290, 1.0
        %v1379 = vadd.f32 %v1292, 1.0
        %v1380 = vadd.f32 %v1294, 1.0
        %v1381 = vadd.f32 %v1296, 1.0
        %v1382 = vadd.f32 %v1298, 1.0
        %v1383 = vadd.f32 %v1300, 1.0
        %v1384 = vadd.f32 %v1302, 1.0
        %v1385 = vadd.f32 %v1304, 1.0
        %v1386 = vadd.f32 %v1306, 1.0
        %v1387 = vadd.f32 %v1308, 1.0
        %v1388 = vadd.f32 %v1310, 1.0
        %v1389 = vadd.f32 %v1312, 1.0
        %v1390 = vadd.f32 %v1314, 1.0
        %v1391 = vadd.f32 %v1316, 1.0
        %v1392 = vadd.f32 %v1318, 1.0
        %v1393 = vadd.f32 %v1320, 1.0
        %v1394 = vadd.f32 %v1322, 1.0
        %v1395 = vadd.f32 %v1324, 1.0
        %v1396 = vadd.f32 %v1326, 1.0
        %v1397 = vadd.f32 %v1328, 1.0
        %v1398 = vadd.f32 %v1330, 1.0
        %v1399 = vadd.f32 %v1332, 1.0
        %v1400 = vadd.f32 %v1334, 1.0
        %v1401 = vadd.f32 %v1336, 1.0
        %v1402 = vadd.f32 %v1338, 1.0
        %v1403 = vadd.f32 %v1340, 1.0
        %v1404 = vadd.f32 %v1342, 1.0
        %v1405 = vadd.f32 %v1344, 1.0
        %v1406 = vadd.f32 %v1346, 1.0
        %v1407 = vadd.f32 %v1348, 1.0
        %v1408 = vadd.f32 %v1350, 1.0
        %v1409 = vadd.f32 %v1352, 1.0
        %v1410 = vadd.f32 %v1354, 1.0
        %v1411 = vadd.f32 %v1356, 1.0
        %v1412 = vadd.f32 %v1358, 1.0
        %v1413 = vadd.f32 %v1360, 1.0
        %v1414 = vadd.f32 %v1362, 1.0
        %v1415 = vadd.f32 %v1364, 1.0
        %v1416 = vadd.f32 %v1366, 1.0
        %v1417 = vadd.f32 %v1368, 1.0
        %v1418 = vadd.f32 %v1370, 1.0
        %v1419 = vrcp.pop %v1371
        %v1420 = vrcp.pop %v1372
        %v1421 = vrcp.pop %v1373
        %v1422 = vrcp.pop %v1374
        %v1423 = vrcp.pop %v1375
        %v1424 = vrcp.pop %v1376
        %v1425 = vrcp.pop %v1377
        %v1426 = vrcp.pop %v1378
        %v1427 = vrcp.pop %v1379
        %v1428 = vrcp.pop %v1380
        %v1429 = vrcp.pop %v1381
        %v1430 = vrcp.pop %v1382
        %v1431 = vrcp.pop %v1383
        %v1432 = vrcp.pop %v1384
        %v1433 = vrcp.pop %v1385
        %v1434 = vrcp.pop %v1386
        %v1435 = vrcp.pop %v1387
        %v1436 = vrcp.pop %v1388
        %v1437 = vrcp.pop %v1389
        %v1438 = vrcp.pop %v1390
        %v1439 = vrcp.pop %v1391
        %v1440 = vrcp.pop %v1392
        %v1441 = vrcp.pop %v1393
        %v1442 = vrcp.pop %v1394
        %v1443 = vrcp.pop %v1395
        %v1444 = vrcp.pop %v1396
        %v1445 = vrcp.pop %v1397
        %v1446 = vrcp.pop %v1398
        %v1447 = vrcp.pop %v1399
        %v1448 = vrcp.pop %v1400
        %v1449 = vrcp.pop %v1401
        %v1450 = vrcp.pop %v1402
        %v1451 = vrcp.pop %v1403
        %v1452 = vrcp.pop %v1404
        %v1453 = vrcp.pop %v1405
        %v1454 = vrcp.pop %v1406
        %v1455 = vrcp.pop %v1407
        %v1456 = vrcp.pop %v1408
        %v1457 = vrcp.pop %v1409
        %v1458 = vrcp.pop %v1410
        %v1459 = vrcp.pop %v1411
        %v1460 = vrcp.pop %v1412
        %v1461 = vrcp.pop %v1413
        %v1462 = vrcp.pop %v1414
        %v1463 = vrcp.pop %v1415
        %v1464 = vrcp.pop %v1416
        %v1465 = vrcp.pop %v1417
        %v1466 = vrcp.pop %v1418
        %1515 = vrot.lane.b32.xlu0 %v1419, 64
        %v1516 = vpop.permute.xlu0 %1515
        %1517 = vrot.lane.b32.xlu0 %v1420, 64
        %v1518 = vpop.permute.xlu0 %1517
        %1519 = vrot.lane.b32.xlu0 %v1421, 64
        %v1520 = vpop.permute.xlu0 %1519
        %1521 = vrot.lane.b32.xlu0 %v1422, 64
        %v1522 = vpop.permute.xlu0 %1521
        %1523 = vrot.lane.b32.xlu0 %v1423, 64
        %v1524 = vpop.permute.xlu0 %1523
        %1525 = vrot.lane.b32.xlu0 %v1424, 64
        %v1526 = vpop.permute.xlu0 %1525
        %1527 = vrot.lane.b32.xlu0 %v1425, 64
        %v1528 = vpop.permute.xlu0 %1527
        %1529 = vrot.lane.b32.xlu0 %v1426, 64
        %v1530 = vpop.permute.xlu0 %1529
        %1531 = vrot.lane.b32.xlu0 %v1427, 64
        %v1532 = vpop.permute.xlu0 %1531
        %1533 = vrot.lane.b32.xlu0 %v1428, 64
        %v1534 = vpop.permute.xlu0 %1533
        %1535 = vrot.lane.b32.xlu0 %v1429, 64
        %v1536 = vpop.permute.xlu0 %1535
        %1537 = vrot.lane.b32.xlu0 %v1430, 64
        %v1538 = vpop.permute.xlu0 %1537
        %1539 = vrot.lane.b32.xlu0 %v1431, 64
        %v1540 = vpop.permute.xlu0 %1539
        %1541 = vrot.lane.b32.xlu0 %v1432, 64
        %v1542 = vpop.permute.xlu0 %1541
        %1543 = vrot.lane.b32.xlu0 %v1433, 64
        %v1544 = vpop.permute.xlu0 %1543
        %1545 = vrot.lane.b32.xlu0 %v1434, 64
        %v1546 = vpop.permute.xlu0 %1545
        %1547 = vrot.lane.b32.xlu0 %v1435, 64
        %v1548 = vpop.permute.xlu0 %1547
        %1549 = vrot.lane.b32.xlu0 %v1436, 64
        %v1550 = vpop.permute.xlu0 %1549
        %1551 = vrot.lane.b32.xlu0 %v1437, 64
        %v1552 = vpop.permute.xlu0 %1551
        %1553 = vrot.lane.b32.xlu0 %v1438, 64
        %v1554 = vpop.permute.xlu0 %1553
        %1555 = vrot.lane.b32.xlu0 %v1439, 64
        %v1556 = vpop.permute.xlu0 %1555
        %1557 = vrot.lane.b32.xlu0 %v1440, 64
        %v1558 = vpop.permute.xlu0 %1557
        %1559 = vrot.lane.b32.xlu0 %v1441, 64
        %v1560 = vpop.permute.xlu0 %1559
        %1561 = vrot.lane.b32.xlu0 %v1442, 64
        %v1562 = vpop.permute.xlu0 %1561
        %1563 = vrot.lane.b32.xlu0 %v1443, 64
        %v1564 = vpop.permute.xlu0 %1563
        %1565 = vrot.lane.b32.xlu0 %v1444, 64
        %v1566 = vpop.permute.xlu0 %1565
        %1567 = vrot.lane.b32.xlu0 %v1445, 64
        %v1568 = vpop.permute.xlu0 %1567
        %1569 = vrot.lane.b32.xlu0 %v1446, 64
        %v1570 = vpop.permute.xlu0 %1569
        %1571 = vrot.lane.b32.xlu0 %v1447, 64
        %v1572 = vpop.permute.xlu0 %1571
        %1573 = vrot.lane.b32.xlu0 %v1448, 64
        %v1574 = vpop.permute.xlu0 %1573
        %1575 = vrot.lane.b32.xlu0 %v1449, 64
        %v1576 = vpop.permute.xlu0 %1575
        %1577 = vrot.lane.b32.xlu0 %v1450, 64
        %v1578 = vpop.permute.xlu0 %1577
        %1579 = vrot.lane.b32.xlu0 %v1451, 64
        %v1580 = vpop.permute.xlu0 %1579
        %1581 = vrot.lane.b32.xlu0 %v1452, 64
        %v1582 = vpop.permute.xlu0 %1581
        %1583 = vrot.lane.b32.xlu0 %v1453, 64
        %v1584 = vpop.permute.xlu0 %1583
        %1585 = vrot.lane.b32.xlu0 %v1454, 64
        %v1586 = vpop.permute.xlu0 %1585
        %1587 = vrot.lane.b32.xlu0 %v1455, 64
        %v1588 = vpop.permute.xlu0 %1587
        %1589 = vrot.lane.b32.xlu0 %v1456, 64
        %v1590 = vpop.permute.xlu0 %1589
        %1591 = vrot.lane.b32.xlu0 %v1457, 64
        %v1592 = vpop.permute.xlu0 %1591
        %1593 = vrot.lane.b32.xlu0 %v1458, 64
        %v1594 = vpop.permute.xlu0 %1593
        %1595 = vrot.lane.b32.xlu0 %v1459, 64
        %v1596 = vpop.permute.xlu0 %1595
        %1597 = vrot.lane.b32.xlu0 %v1460, 64
        %v1598 = vpop.permute.xlu0 %1597
        %1599 = vrot.lane.b32.xlu0 %v1461, 64
        %v1600 = vpop.permute.xlu0 %1599
        %1601 = vrot.lane.b32.xlu0 %v1462, 64
        %v1602 = vpop.permute.xlu0 %1601
        %1603 = vrot.lane.b32.xlu0 %v1463, 64
        %v1604 = vpop.permute.xlu0 %1603
        %1605 = vrot.lane.b32.xlu0 %v1464, 64
        %v1606 = vpop.permute.xlu0 %1605
        %1607 = vrot.lane.b32.xlu0 %v1465, 64
        %v1608 = vpop.permute.xlu0 %1607
        %1609 = vrot.lane.b32.xlu0 %v1466, 64
        %v1610 = vpop.permute.xlu0 %1609
        %v1659 = vmul.f32 %v1037, %v1516
        %v1660 = vmul.f32 %v1040, %v1518
        %v1661 = vmul.f32 %v1045, %v1520
        %v1662 = vmul.f32 %v1048, %v1522
        %v1663 = vmul.f32 %v1053, %v1524
        %v1664 = vmul.f32 %v1056, %v1526
        %v1665 = vmul.f32 %v1061, %v1528
        %v1666 = vmul.f32 %v1064, %v1530
        %v1667 = vmul.f32 %v1069, %v1532
        %v1668 = vmul.f32 %v1072, %v1534
        %v1669 = vmul.f32 %v1077, %v1536
        %v1670 = vmul.f32 %v1080, %v1538
        %v1671 = vmul.f32 %v1085, %v1540
        %v1672 = vmul.f32 %v1088, %v1542
        %v1673 = vmul.f32 %v1093, %v1544
        %v1674 = vmul.f32 %v1096, %v1546
        %v1675 = vmul.f32 %v1101, %v1548
        %v1676 = vmul.f32 %v1104, %v1550
        %v1677 = vmul.f32 %v1109, %v1552
        %v1678 = vmul.f32 %v1112, %v1554
        %v1679 = vmul.f32 %v1117, %v1556
        %v1680 = vmul.f32 %v1120, %v1558
        %v1681 = vmul.f32 %v1125, %v1560
        %v1682 = vmul.f32 %v1128, %v1562
        %v1683 = vmul.f32 %v1133, %v1564
        %v1684 = vmul.f32 %v1136, %v1566
        %v1685 = vmul.f32 %v1141, %v1568
        %v1686 = vmul.f32 %v1144, %v1570
        %v1687 = vmul.f32 %v1149, %v1572
        %v1688 = vmul.f32 %v1152, %v1574
        %v1689 = vmul.f32 %v1157, %v1576
        %v1690 = vmul.f32 %v1160, %v1578
        %v1691 = vmul.f32 %v1165, %v1580
        %v1692 = vmul.f32 %v1168, %v1582
        %v1693 = vmul.f32 %v1173, %v1584
        %v1694 = vmul.f32 %v1176, %v1586
        %v1695 = vmul.f32 %v1181, %v1588
        %v1696 = vmul.f32 %v1184, %v1590
        %v1697 = vmul.f32 %v1189, %v1592
        %v1698 = vmul.f32 %v1192, %v1594
        %v1699 = vmul.f32 %v1197, %v1596
        %v1700 = vmul.f32 %v1200, %v1598
        %v1701 = vmul.f32 %v1205, %v1600
        %v1702 = vmul.f32 %v1208, %v1602
        %v1703 = vmul.f32 %v1213, %v1604
        %v1704 = vmul.f32 %v1216, %v1606
        %v1705 = vmul.f32 %v1221, %v1608
        %v1706 = vmul.f32 %v1224, %v1610
        %vm1707 = vcmask 523264
        %1708 = vst.msk [vmem:[%s193] sm:$0xff] %vm1707, %v1659
        %1709 = vst.msk [vmem:[%s193 + $0x8] sm:$0xff] %vm1707, %v1660
        %1710 = vst.msk [vmem:[%s193 + $0x10] sm:$0xff] %vm1707, %v1661
        %1711 = vst.msk [vmem:[%s193 + $0x18] sm:$0xff] %vm1707, %v1662
        %1712 = vst.msk [vmem:[%s193 + $0x20] sm:$0xff] %vm1707, %v1663
        %1713 = vst.msk [vmem:[%s193 + $0x28] sm:$0xff] %vm1707, %v1664
        %1714 = vst.msk [vmem:[%s193 + $0x30] sm:$0xff] %vm1707, %v1665
        %1715 = vst.msk [vmem:[%s193 + $0x38] sm:$0xff] %vm1707, %v1666
        %1716 = vst.msk [vmem:[%s193 + $0x40] sm:$0xff] %vm1707, %v1667
        %1717 = vst.msk [vmem:[%s193 + $0x48] sm:$0xff] %vm1707, %v1668
        %1718 = vst.msk [vmem:[%s193 + $0x50] sm:$0xff] %vm1707, %v1669
        %1719 = vst.msk [vmem:[%s193 + $0x58] sm:$0xff] %vm1707, %v1670
        %1720 = vst.msk [vmem:[%s193 + $0x60] sm:$0xff] %vm1707, %v1671
        %1721 = vst.msk [vmem:[%s193 + $0x68] sm:$0xff] %vm1707, %v1672
        %1722 = vst.msk [vmem:[%s193 + $0x70] sm:$0xff] %vm1707, %v1673
        %1723 = vst.msk [vmem:[%s193 + $0x78] sm:$0xff] %vm1707, %v1674
        %1724 = vst.msk [vmem:[%s193 + $0x80] sm:$0xff] %vm1707, %v1675
        %1725 = vst.msk [vmem:[%s193 + $0x88] sm:$0xff] %vm1707, %v1676
        %1726 = vst.msk [vmem:[%s193 + $0x90] sm:$0xff] %vm1707, %v1677
        %1727 = vst.msk [vmem:[%s193 + $0x98] sm:$0xff] %vm1707, %v1678
        %1728 = vst.msk [vmem:[%s193 + $0xa0] sm:$0xff] %vm1707, %v1679
        %1729 = vst.msk [vmem:[%s193 + $0xa8] sm:$0xff] %vm1707, %v1680
        %1730 = vst.msk [vmem:[%s193 + $0xb0] sm:$0xff] %vm1707, %v1681
        %1731 = vst.msk [vmem:[%s193 + $0xb8] sm:$0xff] %vm1707, %v1682
        %1732 = vst.msk [vmem:[%s193 + $0xc0] sm:$0xff] %vm1707, %v1683
        %1733 = vst.msk [vmem:[%s193 + $0xc8] sm:$0xff] %vm1707, %v1684
        %1734 = vst.msk [vmem:[%s193 + $0xd0] sm:$0xff] %vm1707, %v1685
        %1735 = vst.msk [vmem:[%s193 + $0xd8] sm:$0xff] %vm1707, %v1686
        %1736 = vst.msk [vmem:[%s193 + $0xe0] sm:$0xff] %vm1707, %v1687
        %1737 = vst.msk [vmem:[%s193 + $0xe8] sm:$0xff] %vm1707, %v1688
        %1738 = vst.msk [vmem:[%s193 + $0xf0] sm:$0xff] %vm1707, %v1689
        %1739 = vst.msk [vmem:[%s193 + $0xf8] sm:$0xff] %vm1707, %v1690
        %1740 = vst.msk [vmem:[%s193 + $0x100] sm:$0xff] %vm1707, %v1691
        %1741 = vst.msk [vmem:[%s193 + $0x108] sm:$0xff] %vm1707, %v1692
        %1742 = vst.msk [vmem:[%s193 + $0x110] sm:$0xff] %vm1707, %v1693
        %1743 = vst.msk [vmem:[%s193 + $0x118] sm:$0xff] %vm1707, %v1694
        %1744 = vst.msk [vmem:[%s193 + $0x120] sm:$0xff] %vm1707, %v1695
        %1745 = vst.msk [vmem:[%s193 + $0x128] sm:$0xff] %vm1707, %v1696
        %1746 = vst.msk [vmem:[%s193 + $0x130] sm:$0xff] %vm1707, %v1697
        %1747 = vst.msk [vmem:[%s193 + $0x138] sm:$0xff] %vm1707, %v1698
        %1748 = vst.msk [vmem:[%s193 + $0x140] sm:$0xff] %vm1707, %v1699
        %1749 = vst.msk [vmem:[%s193 + $0x148] sm:$0xff] %vm1707, %v1700
        %1750 = vst.msk [vmem:[%s193 + $0x150] sm:$0xff] %vm1707, %v1701
        %1751 = vst.msk [vmem:[%s193 + $0x158] sm:$0xff] %vm1707, %v1702
        %1752 = vst.msk [vmem:[%s193 + $0x160] sm:$0xff] %vm1707, %v1703
        %1753 = vst.msk [vmem:[%s193 + $0x168] sm:$0xff] %vm1707, %v1704
        %1754 = vst.msk [vmem:[%s193 + $0x170] sm:$0xff] %vm1707, %v1705
        %1755 = vst.msk [vmem:[%s193 + $0x178] sm:$0xff] %vm1707, %v1706
        %s1756 = sand.u32 %s115, 1
        %s1757 = scalar_lea.sflag [#allocation3], %s1756
        %s1758 = sand.u32 %s115, 1
        %s1759 = smul.addr %s1758, 384
        %s1760 = scalar_lea.vmem [#allocation2], %s1759
        // Predicated region
        $region37: #{tpu_custom_call.1} parent=35 // pred_check
          %p1761 = pneg %p125
        $region38: #{tpu_custom_call.1} parent=35 // pred_check_branch
          %1763 = sbr.rel (%p1761) target = $region40
        $region39: #{tpu_custom_call.1} parent=35 // pred_region
          %s1764 = smul.u32 8, %s18
          %s1766 = ssub.s32 6144, 6144
          %1767 = vsyncadd %s1757, %s1766
          %s1768 = smul.addr %s1764, 6
          %s1769 = smul.addr %s1768, 128
          %s1770 = scalar_lea.hbm %s4, %s1769
          %s1771 = sshll.u32 %s1760, 4
          %s1772 = int_to_ptr.vmem [resolvable:$true] %s1771
          %1777 = dma.vmem_to_hbm [thread:$0]  %s1772, 6144, %s1770, %s1757, 128, 128, 8
        $region40: #{tpu_custom_call.1} parent=35 // pred_fallthru
          _
      $region36: #{tpu_custom_call.1} parent=5 // pred_fallthru
        _
      %p1778 = scmp.le.s32.totalorder 2, %s13
      // Predicated region
      $region41: #{tpu_custom_call.1} parent=5 // pred_check
        %p1779 = pneg %p1778
      $region42: #{tpu_custom_call.1} parent=5 // pred_check_branch
        %1781 = sbr.rel (%p1779) target = $region44
      $region43: #{tpu_custom_call.1} parent=5 // pred_region
        %s1782 = ssub.s32 %s13, 2
        // Predicated region
        $region45: #{tpu_custom_call.1} parent=43 // pred_check
          %p1783 = pneg %p131
        $region46: #{tpu_custom_call.1} parent=43 // pred_check_branch
          %1785 = sbr.rel (%p1783) target = $region48
        $region47: #{tpu_custom_call.1} parent=43 // pred_region
          %s1786 = sand.u32 %s116, 1
          %s1787 = scalar_lea.sflag [#allocation3], %s1786
          %s1788 = sand.u32 %s116, 1
          %s1789 = smul.addr %s1788, 384
          %s1790 = scalar_lea.vmem [#allocation2], %s1789
          %1791 = dma.done %s1787, 6144
        $region48: #{tpu_custom_call.1} parent=43 // pred_fallthru
          _
      $region44: #{tpu_custom_call.1} parent=5 // pred_fallthru
        _
    $region6: #{tpu_custom_call.1} parent=1 // loop_footer
      %s17 = sadd.s32 1, %s13
    $region7: #{tpu_custom_call.1} parent=1 // loop_footer_branch
      %12 = sbr.rel target = $region3
    $region8: #{tpu_custom_call.1} parent=1 // loop_exit
      _
    %1792 = vsyncpa [#allocation3], 1
    %s1793 = scalar_lea.sflag [#allocation3], 1
    %1794 = vsyncpa %s1793, 1

</llo_original>
